<compile_context>
chip_gen: v5e
topology: v5e:2x2
jax: 0.10.0
libtpu: 0.0.40
codegen_flags: <defaults>
</compile_context>

<pallas_src>
import jax
import jax.numpy as jnp
from jax.experimental import pallas as pl
from jax.experimental.pallas import tpu as pltpu

# ---- small hyper-params consistent with the module ----
B, T, S, D, H, DFF = 2, 8, 8, 32, 4, 64
DK = D // H
EPS = 1e-6

# rows of the packed (9, D) vector bank
_BQ, _BK, _BV, _BO, _G1, _BE1, _G2, _BE2, _BF2 = range(9)


def _layernorm(x, gamma, beta):
    # torch.Tensor.std is unbiased (ddof=1); the module divides by (std + eps).
    mean = jnp.mean(x, axis=-1, keepdims=True)
    var = jnp.sum((x - mean) ** 2, axis=-1, keepdims=True) * (1.0 / (x.shape[-1] - 1))
    inv = 1.0 / (jnp.sqrt(var) + EPS)        # one reciprocal per row, then multiply
    return gamma * (x - mean) * inv + beta


def decoder_layer_kernel(x_ref, sk_ref, mem_ref, mask_ref,
                         attw_ref, vec_ref, w1_ref, bf1_ref, w2_ref,
                         o_ref):
    x = x_ref[...]          # (B*T, D)
    sk = sk_ref[...]        # (B*S, D)
    mem = mem_ref[...]      # (B*S, D)
    vec = vec_ref[...]      # (9, D)  packed biases / LN params

    # ---- sublayer 0: src-attention with pre-LayerNorm + residual ----
    xn = _layernorm(x, vec[_G1:_G1 + 1], vec[_BE1:_BE1 + 1])
    q = jnp.dot(xn, attw_ref[0], preferred_element_type=jnp.float32) + vec[_BQ:_BQ + 1]
    k = jnp.dot(sk, attw_ref[1], preferred_element_type=jnp.float32) + vec[_BK:_BK + 1]
    v = jnp.dot(mem, attw_ref[2], preferred_element_type=jnp.float32) + vec[_BV:_BV + 1]

    qb = q.reshape(B, T, D)
    kb = k.reshape(B, S, D)
    vb = v.reshape(B, S, D)

    # additive mask, computed once (hoisted out of the head loop)
    add_mask = jnp.where(mask_ref[...] == 0, jnp.float32(-1e9), jnp.float32(0.0))

    scale = 1.0 / (DK ** 0.5)
    heads = []
    for h in range(H):                              # static unroll, H = 4
        lo = h * DK
        qh = qb[:, :, lo:lo + DK]                   # (B, T, DK)
        kh = kb[:, :, lo:lo + DK]                   # (B, S, DK)
        vh = vb[:, :, lo:lo + DK]                   # (B, S, DK)
        s = jnp.einsum('btd,bsd->bts', qh, kh,
                       preferred_element_type=jnp.float32) * scale
        s = s + add_mask                            # (B, T, S)
        smax = jnp.max(s, axis=-1, keepdims=True)
        p = jnp.exp(s - smax)
        p = p * (1.0 / jnp.sum(p, axis=-1, keepdims=True))
        heads.append(jnp.einsum('bts,bsd->btd', p, vh,
                                preferred_element_type=jnp.float32))
    attn = jnp.concatenate(heads, axis=-1).reshape(B * T, D)
    attn = jnp.dot(attn, attw_ref[3], preferred_element_type=jnp.float32) + vec[_BO:_BO + 1]
    # TODO(synk): dropout omitted (identity at inference)
    x1 = x + attn

    # ---- sublayer 1: position-wise FFN with pre-LayerNorm + residual ----
    xn2 = _layernorm(x1, vec[_G2:_G2 + 1], vec[_BE2:_BE2 + 1])
    hdd = jnp.dot(xn2, w1_ref[...], preferred_element_type=jnp.float32) + bf1_ref[...]
    hdd = jnp.maximum(hdd, 0.0)
    ff = jnp.dot(hdd, w2_ref[...], preferred_element_type=jnp.float32) + vec[_BF2:_BF2 + 1]
    o_ref[...] = x1 + ff


def decoder_layer(x, src_key, memory, tgt_mask, params):
    (wq, bq, wk, bk, wv, bv, wo, bo,
     g1, be1, g2, be2, w1, bf1, w2, bf2) = params

    # pack parameters into few, larger refs (fewer DMA descriptors)
    attw = jnp.stack([wq, wk, wv, wo], axis=0)                       # (4, D, D)
    vecs = jnp.concatenate([bq, bk, bv, bo, g1, be1, g2, be2, bf2],  # (9, D)
                           axis=0)

    # flatten batch into the row (sublane) dimension: one fused grid step
    x2 = x.reshape(B * T, D)
    sk2 = src_key.reshape(B * S, D)
    mem2 = memory.reshape(B * S, D)

    full = lambda shp: pl.BlockSpec(shp, lambda i: (0,) * len(shp))

    out = pl.pallas_call(
        decoder_layer_kernel,
        out_shape=jax.ShapeDtypeStruct((B * T, D), jnp.float32),
        grid=(1,),
        in_specs=[
            full((B * T, D)),        # x
            full((B * S, D)),        # src_key
            full((B * S, D)),        # memory
            full((B, T, S)),         # tgt_mask (0/1)
            full((4, D, D)),         # Wq, Wk, Wv, Wo
            full((9, D)),            # packed biases + LayerNorm params
            full((D, DFF)),          # FFN W1
            full((1, DFF)),          # FFN b1
            full((DFF, D)),          # FFN W2
        ],
        out_specs=full((B * T, D)),
        compiler_params=pltpu.CompilerParams(dimension_semantics=("arbitrary",)),
    )(x2, sk2, mem2, tgt_mask, attw, vecs, w1, bf1, w2)
    return out.reshape(B, T, D)


def reference(x, sk, mem, mask, params):
    (wq, bq, wk, bk, wv, bv, wo, bo, g1, be1, g2, be2, w1, bf1, w2, bf2) = params

    def ln(z, g, b):
        mean = z.mean(-1, keepdims=True)
        var = ((z - mean) ** 2).sum(-1, keepdims=True) / (z.shape[-1] - 1)
        return g * (z - mean) / (jnp.sqrt(var) + EPS) + b

    xn = ln(x, g1, be1)
    q = (xn @ wq + bq).reshape(B, T, H, DK).transpose(0, 2, 1, 3)
    k = (sk @ wk + bk).reshape(B, S, H, DK).transpose(0, 2, 1, 3)
    v = (mem @ wv + bv).reshape(B, S, H, DK).transpose(0, 2, 1, 3)
    scores = jnp.einsum("bhtd,bhsd->bhts", q, k) / jnp.sqrt(jnp.float32(DK))
    scores = jnp.where(mask[:, None, :, :] == 0, -1e9, scores)
    p = jax.nn.softmax(scores, axis=-1)
    o = jnp.einsum("bhts,bhsd->bhtd", p, v).transpose(0, 2, 1, 3).reshape(B, T, D)
    x1 = x + (o @ wo + bo)

    xn2 = ln(x1, g2, be2)
    ff = jnp.maximum(xn2 @ w1 + bf1, 0.0) @ w2 + bf2
    return x1 + ff


if __name__ == "__main__":
    key = jax.random.PRNGKey(0)
    ks = jax.random.split(key, 16)

    x = jax.random.normal(ks[0], (B, T, D), jnp.float32)
    src_key = jax.random.normal(ks[1], (B, S, D), jnp.float32)
    memory = jax.random.normal(ks[2], (B, S, D), jnp.float32)
    # lower-triangular 0/1 mask (tgt_mask semantics), broadcast to every batch
    tgt_mask = jnp.tile(jnp.tril(jnp.ones((T, S), jnp.float32))[None], (B, 1, 1))

    init = lambda k, shp, sc: sc * jax.random.normal(k, shp, jnp.float32)
    params = (
        init(ks[3], (D, D), 0.1), jnp.zeros((1, D), jnp.float32),       # Wq, bq
        init(ks[4], (D, D), 0.1), jnp.zeros((1, D), jnp.float32),       # Wk, bk
        init(ks[5], (D, D), 0.1), jnp.zeros((1, D), jnp.float32),       # Wv, bv
        init(ks[6], (D, D), 0.1), init(ks[7], (1, D), 0.02),            # Wo, bo
        jnp.ones((1, D), jnp.float32), jnp.zeros((1, D), jnp.float32),  # LN0
        jnp.ones((1, D), jnp.float32), jnp.zeros((1, D), jnp.float32),  # LN1
        init(ks[8], (D, DFF), 0.1), init(ks[9], (1, DFF), 0.02),        # W1, b1
        init(ks[10], (DFF, D), 0.1), init(ks[11], (1, D), 0.02),        # W2, b2
    )

    out = decoder_layer(x, src_key, memory, tgt_mask, params)
    out = jax.block_until_ready(out)

    ref = reference(x, src_key, memory, tgt_mask, params)
    assert jnp.allclose(out, ref, atol=1e-4, rtol=1e-4), "mismatch vs reference"
    print("KERNEL_OK")
</pallas_src>

<mosaic_0001>
module attributes {stable_mosaic.version = 11 : i64} {
  func.func @decoder_layer_kernel(%arg0: i32, %arg1: memref<16x32xf32, #tpu.memory_space<vmem>>, %arg2: memref<16x32xf32, #tpu.memory_space<vmem>>, %arg3: memref<16x32xf32, #tpu.memory_space<vmem>>, %arg4: memref<2x8x8xf32, #tpu.memory_space<vmem>>, %arg5: memref<4x32x32xf32, #tpu.memory_space<vmem>>, %arg6: memref<9x32xf32, #tpu.memory_space<vmem>>, %arg7: memref<32x64xf32, #tpu.memory_space<vmem>>, %arg8: memref<1x64xf32, #tpu.memory_space<vmem>>, %arg9: memref<64x32xf32, #tpu.memory_space<vmem>>, %arg10: memref<16x32xf32, #tpu.memory_space<vmem>>) attributes {dimension_semantics = [#tpu.dimension_semantics<arbitrary>], iteration_bounds = array<i64: 1>, scalar_prefetch = 0 : i64, scratch_operands = 0 : i64, tpu.core_type = #tpu.core_type<tc>, window_params = [{pipeline_mode = #tpu.pipeline_mode<synchronous>, transform_indices = @transform_0, window_bounds = array<i64: 16, 32>}, {pipeline_mode = #tpu.pipeline_mode<synchronous>, transform_indices = @transform_1, window_bounds = array<i64: 16, 32>}, {pipeline_mode = #tpu.pipeline_mode<synchronous>, transform_indices = @transform_2, window_bounds = array<i64: 16, 32>}, {pipeline_mode = #tpu.pipeline_mode<synchronous>, transform_indices = @transform_3, window_bounds = array<i64: 2, 8, 8>}, {pipeline_mode = #tpu.pipeline_mode<synchronous>, transform_indices = @transform_4, window_bounds = array<i64: 4, 32, 32>}, {pipeline_mode = #tpu.pipeline_mode<synchronous>, transform_indices = @transform_5, window_bounds = array<i64: 9, 32>}, {pipeline_mode = #tpu.pipeline_mode<synchronous>, transform_indices = @transform_6, window_bounds = array<i64: 32, 64>}, {pipeline_mode = #tpu.pipeline_mode<synchronous>, transform_indices = @transform_7, window_bounds = array<i64: 1, 64>}, {pipeline_mode = #tpu.pipeline_mode<synchronous>, transform_indices = @transform_8, window_bounds = array<i64: 64, 32>}, {pipeline_mode = #tpu.pipeline_mode<synchronous>, transform_indices = @transform_9, window_bounds = array<i64: 16, 32>}]} {
    %c0 = arith.constant 0 : index
    %c0_0 = arith.constant 0 : index
    %0 = vector.load %arg1[%c0, %c0_0] : memref<16x32xf32, #tpu.memory_space<vmem>>, vector<16x32xf32>
    %c0_1 = arith.constant 0 : index
    %c0_2 = arith.constant 0 : index
    %1 = vector.load %arg2[%c0_1, %c0_2] : memref<16x32xf32, #tpu.memory_space<vmem>>, vector<16x32xf32>
    %c0_3 = arith.constant 0 : index
    %c0_4 = arith.constant 0 : index
    %2 = vector.load %arg3[%c0_3, %c0_4] : memref<16x32xf32, #tpu.memory_space<vmem>>, vector<16x32xf32>
    %c0_5 = arith.constant 0 : index
    %c0_6 = arith.constant 0 : index
    %3 = vector.load %arg6[%c0_5, %c0_6] : memref<9x32xf32, #tpu.memory_space<vmem>>, vector<9x32xf32>
    %4 = vector.extract_strided_slice %3 {offsets = [4, 0], sizes = [1, 32], strides = [1, 1]} : vector<9x32xf32> to vector<1x32xf32>
    %5 = vector.extract_strided_slice %3 {offsets = [5, 0], sizes = [1, 32], strides = [1, 1]} : vector<9x32xf32> to vector<1x32xf32>
    %cst = arith.constant dense<0.000000e+00> : vector<16xf32>
    %6 = vector.multi_reduction <add>, %0, %cst [1] : vector<16x32xf32> to vector<16xf32>
    %7 = vector.shape_cast %6 : vector<16xf32> to vector<16x1xf32>
    %cst_7 = arith.constant 3.200000e+01 : f32
    %8 = vector.broadcast %cst_7 : f32 to vector<16x1xf32>
    %9 = arith.divf %7, %8 : vector<16x1xf32>
    %10 = vector.broadcast %9 : vector<16x1xf32> to vector<16x32xf32>
    %11 = arith.subf %0, %10 : vector<16x32xf32>
    %12 = arith.mulf %11, %11 : vector<16x32xf32>
    %cst_8 = arith.constant dense<0.000000e+00> : vector<16xf32>
    %13 = vector.multi_reduction <add>, %12, %cst_8 [1] : vector<16x32xf32> to vector<16xf32>
    %14 = vector.shape_cast %13 : vector<16xf32> to vector<16x1xf32>
    %cst_9 = arith.constant 0.0322580636 : f32
    %15 = vector.broadcast %cst_9 : f32 to vector<16x1xf32>
    %16 = arith.mulf %14, %15 : vector<16x1xf32>
    %17 = math.sqrt %16 : vector<16x1xf32>
    %cst_10 = arith.constant 9.99999997E-7 : f32
    %18 = vector.broadcast %cst_10 : f32 to vector<16x1xf32>
    %19 = arith.addf %17, %18 : vector<16x1xf32>
    %cst_11 = arith.constant 1.000000e+00 : f32
    %20 = vector.broadcast %cst_11 : f32 to vector<16x1xf32>
    %21 = arith.divf %20, %19 : vector<16x1xf32>
    %22 = vector.broadcast %9 : vector<16x1xf32> to vector<16x32xf32>
    %23 = arith.subf %0, %22 : vector<16x32xf32>
    %24 = vector.broadcast %4 : vector<1x32xf32> to vector<16x32xf32>
    %25 = arith.mulf %24, %23 : vector<16x32xf32>
    %26 = vector.broadcast %21 : vector<16x1xf32> to vector<16x32xf32>
    %27 = arith.mulf %25, %26 : vector<16x32xf32>
    %28 = vector.broadcast %5 : vector<1x32xf32> to vector<16x32xf32>
    %29 = arith.addf %27, %28 : vector<16x32xf32>
    %c0_12 = arith.constant 0 : index
    %c0_13 = arith.constant 0 : index
    %c0_14 = arith.constant 0 : index
    %30 = vector.load %arg5[%c0_12, %c0_13, %c0_14] : memref<4x32x32xf32, #tpu.memory_space<vmem>>, vector<1x32x32xf32>
    %31 = vector.shape_cast %30 : vector<1x32x32xf32> to vector<32x32xf32>
    %cst_15 = arith.constant dense<0.000000e+00> : vector<16x32xf32>
    %32 = tpu.matmul %29, %31, %cst_15 {dimension_numbers = #tpu.dot_dimension_numbers<[1], [0], [0], [1], [0, 0, 1, 1], [], []>} : vector<16x32xf32>, vector<32x32xf32>, vector<16x32xf32> -> vector<16x32xf32>
    %33 = vector.extract_strided_slice %3 {offsets = [0, 0], sizes = [1, 32], strides = [1, 1]} : vector<9x32xf32> to vector<1x32xf32>
    %34 = vector.broadcast %33 : vector<1x32xf32> to vector<16x32xf32>
    %35 = arith.addf %32, %34 : vector<16x32xf32>
    %c1 = arith.constant 1 : index
    %c0_16 = arith.constant 0 : index
    %c0_17 = arith.constant 0 : index
    %36 = vector.load %arg5[%c1, %c0_16, %c0_17] : memref<4x32x32xf32, #tpu.memory_space<vmem>>, vector<1x32x32xf32>
    %37 = vector.shape_cast %36 : vector<1x32x32xf32> to vector<32x32xf32>
    %cst_18 = arith.constant dense<0.000000e+00> : vector<16x32xf32>
    %38 = tpu.matmul %1, %37, %cst_18 {dimension_numbers = #tpu.dot_dimension_numbers<[1], [0], [0], [1], [0, 0, 1, 1], [], []>} : vector<16x32xf32>, vector<32x32xf32>, vector<16x32xf32> -> vector<16x32xf32>
    %39 = vector.extract_strided_slice %3 {offsets = [1, 0], sizes = [1, 32], strides = [1, 1]} : vector<9x32xf32> to vector<1x32xf32>
    %40 = vector.broadcast %39 : vector<1x32xf32> to vector<16x32xf32>
    %41 = arith.addf %38, %40 : vector<16x32xf32>
    %c2 = arith.constant 2 : index
    %c0_19 = arith.constant 0 : index
    %c0_20 = arith.constant 0 : index
    %42 = vector.load %arg5[%c2, %c0_19, %c0_20] : memref<4x32x32xf32, #tpu.memory_space<vmem>>, vector<1x32x32xf32>
    %43 = vector.shape_cast %42 : vector<1x32x32xf32> to vector<32x32xf32>
    %cst_21 = arith.constant dense<0.000000e+00> : vector<16x32xf32>
    %44 = tpu.matmul %2, %43, %cst_21 {dimension_numbers = #tpu.dot_dimension_numbers<[1], [0], [0], [1], [0, 0, 1, 1], [], []>} : vector<16x32xf32>, vector<32x32xf32>, vector<16x32xf32> -> vector<16x32xf32>
    %45 = vector.extract_strided_slice %3 {offsets = [2, 0], sizes = [1, 32], strides = [1, 1]} : vector<9x32xf32> to vector<1x32xf32>
    %46 = vector.broadcast %45 : vector<1x32xf32> to vector<16x32xf32>
    %47 = arith.addf %44, %46 : vector<16x32xf32>
    %48 = vector.shape_cast %35 : vector<16x32xf32> to vector<2x8x32xf32>
    %49 = vector.shape_cast %41 : vector<16x32xf32> to vector<2x8x32xf32>
    %50 = vector.shape_cast %47 : vector<16x32xf32> to vector<2x8x32xf32>
    %c0_22 = arith.constant 0 : index
    %c0_23 = arith.constant 0 : index
    %c0_24 = arith.constant 0 : index
    %51 = vector.load %arg4[%c0_22, %c0_23, %c0_24] : memref<2x8x8xf32, #tpu.memory_space<vmem>>, vector<2x8x8xf32>
    %cst_25 = arith.constant 0.000000e+00 : f32
    %52 = vector.broadcast %cst_25 : f32 to vector<2x8x8xf32>
    %53 = arith.cmpf oeq, %51, %52 : vector<2x8x8xf32>
    %cst_26 = arith.constant -1.000000e+09 : f32
    %cst_27 = arith.constant 0.000000e+00 : f32
    %54 = vector.broadcast %cst_26 : f32 to vector<2x8x8xf32>
    %55 = vector.broadcast %cst_27 : f32 to vector<2x8x8xf32>
    %56 = arith.select %53, %54, %55 : vector<2x8x8xi1>, vector<2x8x8xf32>
    %57 = vector.extract_strided_slice %48 {offsets = [0, 0, 0], sizes = [2, 8, 8], strides = [1, 1, 1]} : vector<2x8x32xf32> to vector<2x8x8xf32>
    %58 = vector.extract_strided_slice %49 {offsets = [0, 0, 0], sizes = [2, 8, 8], strides = [1, 1, 1]} : vector<2x8x32xf32> to vector<2x8x8xf32>
    %59 = vector.extract_strided_slice %50 {offsets = [0, 0, 0], sizes = [2, 8, 8], strides = [1, 1, 1]} : vector<2x8x32xf32> to vector<2x8x8xf32>
    "tpu.trace_start"() <{level = 10 : i32, message = "btd,bsd->bts"}> : () -> ()
    %cst_28 = arith.constant dense<0.000000e+00> : vector<2x8x8xf32>
    %60 = tpu.matmul %57, %58, %cst_28 {dimension_numbers = #tpu.dot_dimension_numbers<[2], [2], [1], [1], [0, 0, 0, 1, 1, 1], [0], [0]>} : vector<2x8x8xf32>, vector<2x8x8xf32>, vector<2x8x8xf32> -> vector<2x8x8xf32>
    "tpu.trace_stop"() : () -> ()
    %cst_29 = arith.constant 0.353553385 : f32
    %61 = vector.broadcast %cst_29 : f32 to vector<2x8x8xf32>
    %62 = arith.mulf %60, %61 : vector<2x8x8xf32>
    %63 = arith.addf %62, %56 : vector<2x8x8xf32>
    %cst_30 = arith.constant dense<0xFF800000> : vector<2x8xf32>
    %64 = vector.multi_reduction <maximumf>, %63, %cst_30 [2] : vector<2x8x8xf32> to vector<2x8xf32>
    %65 = vector.shape_cast %64 : vector<2x8xf32> to vector<2x8x1xf32>
    %66 = vector.broadcast %65 : vector<2x8x1xf32> to vector<2x8x8xf32>
    %67 = arith.subf %63, %66 : vector<2x8x8xf32>
    %68 = math.exp %67 : vector<2x8x8xf32>
    %cst_31 = arith.constant dense<0.000000e+00> : vector<2x8xf32>
    %69 = vector.multi_reduction <add>, %68, %cst_31 [2] : vector<2x8x8xf32> to vector<2x8xf32>
    %70 = vector.shape_cast %69 : vector<2x8xf32> to vector<2x8x1xf32>
    %cst_32 = arith.constant 1.000000e+00 : f32
    %71 = vector.broadcast %cst_32 : f32 to vector<2x8x1xf32>
    %72 = arith.divf %71, %70 : vector<2x8x1xf32>
    %73 = vector.broadcast %72 : vector<2x8x1xf32> to vector<2x8x8xf32>
    %74 = arith.mulf %68, %73 : vector<2x8x8xf32>
    "tpu.trace_start"() <{level = 10 : i32, message = "bts,bsd->btd"}> : () -> ()
    %cst_33 = arith.constant dense<0.000000e+00> : vector<2x8x8xf32>
    %75 = tpu.matmul %74, %59, %cst_33 {dimension_numbers = #tpu.dot_dimension_numbers<[2], [1], [1], [2], [0, 0, 0, 1, 1, 2], [0], [0]>} : vector<2x8x8xf32>, vector<2x8x8xf32>, vector<2x8x8xf32> -> vector<2x8x8xf32>
    "tpu.trace_stop"() : () -> ()
    %76 = vector.extract_strided_slice %48 {offsets = [0, 0, 8], sizes = [2, 8, 8], strides = [1, 1, 1]} : vector<2x8x32xf32> to vector<2x8x8xf32>
    %77 = vector.extract_strided_slice %49 {offsets = [0, 0, 8], sizes = [2, 8, 8], strides = [1, 1, 1]} : vector<2x8x32xf32> to vector<2x8x8xf32>
    %78 = vector.extract_strided_slice %50 {offsets = [0, 0, 8], sizes = [2, 8, 8], strides = [1, 1, 1]} : vector<2x8x32xf32> to vector<2x8x8xf32>
    "tpu.trace_start"() <{level = 10 : i32, message = "btd,bsd->bts"}> : () -> ()
    %cst_34 = arith.constant dense<0.000000e+00> : vector<2x8x8xf32>
    %79 = tpu.matmul %76, %77, %cst_34 {dimension_numbers = #tpu.dot_dimension_numbers<[2], [2], [1], [1], [0, 0, 0, 1, 1, 1], [0], [0]>} : vector<2x8x8xf32>, vector<2x8x8xf32>, vector<2x8x8xf32> -> vector<2x8x8xf32>
    "tpu.trace_stop"() : () -> ()
    %cst_35 = arith.constant 0.353553385 : f32
    %80 = vector.broadcast %cst_35 : f32 to vector<2x8x8xf32>
    %81 = arith.mulf %79, %80 : vector<2x8x8xf32>
    %82 = arith.addf %81, %56 : vector<2x8x8xf32>
    %cst_36 = arith.constant dense<0xFF800000> : vector<2x8xf32>
    %83 = vector.multi_reduction <maximumf>, %82, %cst_36 [2] : vector<2x8x8xf32> to vector<2x8xf32>
    %84 = vector.shape_cast %83 : vector<2x8xf32> to vector<2x8x1xf32>
    %85 = vector.broadcast %84 : vector<2x8x1xf32> to vector<2x8x8xf32>
    %86 = arith.subf %82, %85 : vector<2x8x8xf32>
    %87 = math.exp %86 : vector<2x8x8xf32>
    %cst_37 = arith.constant dense<0.000000e+00> : vector<2x8xf32>
    %88 = vector.multi_reduction <add>, %87, %cst_37 [2] : vector<2x8x8xf32> to vector<2x8xf32>
    %89 = vector.shape_cast %88 : vector<2x8xf32> to vector<2x8x1xf32>
    %cst_38 = arith.constant 1.000000e+00 : f32
    %90 = vector.broadcast %cst_38 : f32 to vector<2x8x1xf32>
    %91 = arith.divf %90, %89 : vector<2x8x1xf32>
    %92 = vector.broadcast %91 : vector<2x8x1xf32> to vector<2x8x8xf32>
    %93 = arith.mulf %87, %92 : vector<2x8x8xf32>
    "tpu.trace_start"() <{level = 10 : i32, message = "bts,bsd->btd"}> : () -> ()
    %cst_39 = arith.constant dense<0.000000e+00> : vector<2x8x8xf32>
    %94 = tpu.matmul %93, %78, %cst_39 {dimension_numbers = #tpu.dot_dimension_numbers<[2], [1], [1], [2], [0, 0, 0, 1, 1, 2], [0], [0]>} : vector<2x8x8xf32>, vector<2x8x8xf32>, vector<2x8x8xf32> -> vector<2x8x8xf32>
    "tpu.trace_stop"() : () -> ()
    %95 = vector.extract_strided_slice %48 {offsets = [0, 0, 16], sizes = [2, 8, 8], strides = [1, 1, 1]} : vector<2x8x32xf32> to vector<2x8x8xf32>
    %96 = vector.extract_strided_slice %49 {offsets = [0, 0, 16], sizes = [2, 8, 8], strides = [1, 1, 1]} : vector<2x8x32xf32> to vector<2x8x8xf32>
    %97 = vector.extract_strided_slice %50 {offsets = [0, 0, 16], sizes = [2, 8, 8], strides = [1, 1, 1]} : vector<2x8x32xf32> to vector<2x8x8xf32>
    "tpu.trace_start"() <{level = 10 : i32, message = "btd,bsd->bts"}> : () -> ()
    %cst_40 = arith.constant dense<0.000000e+00> : vector<2x8x8xf32>
    %98 = tpu.matmul %95, %96, %cst_40 {dimension_numbers = #tpu.dot_dimension_numbers<[2], [2], [1], [1], [0, 0, 0, 1, 1, 1], [0], [0]>} : vector<2x8x8xf32>, vector<2x8x8xf32>, vector<2x8x8xf32> -> vector<2x8x8xf32>
    "tpu.trace_stop"() : () -> ()
    %cst_41 = arith.constant 0.353553385 : f32
    %99 = vector.broadcast %cst_41 : f32 to vector<2x8x8xf32>
    %100 = arith.mulf %98, %99 : vector<2x8x8xf32>
    %101 = arith.addf %100, %56 : vector<2x8x8xf32>
    %cst_42 = arith.constant dense<0xFF800000> : vector<2x8xf32>
    %102 = vector.multi_reduction <maximumf>, %101, %cst_42 [2] : vector<2x8x8xf32> to vector<2x8xf32>
    %103 = vector.shape_cast %102 : vector<2x8xf32> to vector<2x8x1xf32>
    %104 = vector.broadcast %103 : vector<2x8x1xf32> to vector<2x8x8xf32>
    %105 = arith.subf %101, %104 : vector<2x8x8xf32>
    %106 = math.exp %105 : vector<2x8x8xf32>
    %cst_43 = arith.constant dense<0.000000e+00> : vector<2x8xf32>
    %107 = vector.multi_reduction <add>, %106, %cst_43 [2] : vector<2x8x8xf32> to vector<2x8xf32>
    %108 = vector.shape_cast %107 : vector<2x8xf32> to vector<2x8x1xf32>
    %cst_44 = arith.constant 1.000000e+00 : f32
    %109 = vector.broadcast %cst_44 : f32 to vector<2x8x1xf32>
    %110 = arith.divf %109, %108 : vector<2x8x1xf32>
    %111 = vector.broadcast %110 : vector<2x8x1xf32> to vector<2x8x8xf32>
    %112 = arith.mulf %106, %111 : vector<2x8x8xf32>
    "tpu.trace_start"() <{level = 10 : i32, message = "bts,bsd->btd"}> : () -> ()
    %cst_45 = arith.constant dense<0.000000e+00> : vector<2x8x8xf32>
    %113 = tpu.matmul %112, %97, %cst_45 {dimension_numbers = #tpu.dot_dimension_numbers<[2], [1], [1], [2], [0, 0, 0, 1, 1, 2], [0], [0]>} : vector<2x8x8xf32>, vector<2x8x8xf32>, vector<2x8x8xf32> -> vector<2x8x8xf32>
    "tpu.trace_stop"() : () -> ()
    %114 = vector.extract_strided_slice %48 {offsets = [0, 0, 24], sizes = [2, 8, 8], strides = [1, 1, 1]} : vector<2x8x32xf32> to vector<2x8x8xf32>
    %115 = vector.extract_strided_slice %49 {offsets = [0, 0, 24], sizes = [2, 8, 8], strides = [1, 1, 1]} : vector<2x8x32xf32> to vector<2x8x8xf32>
    %116 = vector.extract_strided_slice %50 {offsets = [0, 0, 24], sizes = [2, 8, 8], strides = [1, 1, 1]} : vector<2x8x32xf32> to vector<2x8x8xf32>
    "tpu.trace_start"() <{level = 10 : i32, message = "btd,bsd->bts"}> : () -> ()
    %cst_46 = arith.constant dense<0.000000e+00> : vector<2x8x8xf32>
    %117 = tpu.matmul %114, %115, %cst_46 {dimension_numbers = #tpu.dot_dimension_numbers<[2], [2], [1], [1], [0, 0, 0, 1, 1, 1], [0], [0]>} : vector<2x8x8xf32>, vector<2x8x8xf32>, vector<2x8x8xf32> -> vector<2x8x8xf32>
    "tpu.trace_stop"() : () -> ()
    %cst_47 = arith.constant 0.353553385 : f32
    %118 = vector.broadcast %cst_47 : f32 to vector<2x8x8xf32>
    %119 = arith.mulf %117, %118 : vector<2x8x8xf32>
    %120 = arith.addf %119, %56 : vector<2x8x8xf32>
    %cst_48 = arith.constant dense<0xFF800000> : vector<2x8xf32>
    %121 = vector.multi_reduction <maximumf>, %120, %cst_48 [2] : vector<2x8x8xf32> to vector<2x8xf32>
    %122 = vector.shape_cast %121 : vector<2x8xf32> to vector<2x8x1xf32>
    %123 = vector.broadcast %122 : vector<2x8x1xf32> to vector<2x8x8xf32>
    %124 = arith.subf %120, %123 : vector<2x8x8xf32>
    %125 = math.exp %124 : vector<2x8x8xf32>
    %cst_49 = arith.constant dense<0.000000e+00> : vector<2x8xf32>
    %126 = vector.multi_reduction <add>, %125, %cst_49 [2] : vector<2x8x8xf32> to vector<2x8xf32>
    %127 = vector.shape_cast %126 : vector<2x8xf32> to vector<2x8x1xf32>
    %cst_50 = arith.constant 1.000000e+00 : f32
    %128 = vector.broadcast %cst_50 : f32 to vector<2x8x1xf32>
    %129 = arith.divf %128, %127 : vector<2x8x1xf32>
    %130 = vector.broadcast %129 : vector<2x8x1xf32> to vector<2x8x8xf32>
    %131 = arith.mulf %125, %130 : vector<2x8x8xf32>
    "tpu.trace_start"() <{level = 10 : i32, message = "bts,bsd->btd"}> : () -> ()
    %cst_51 = arith.constant dense<0.000000e+00> : vector<2x8x8xf32>
    %132 = tpu.matmul %131, %116, %cst_51 {dimension_numbers = #tpu.dot_dimension_numbers<[2], [1], [1], [2], [0, 0, 0, 1, 1, 2], [0], [0]>} : vector<2x8x8xf32>, vector<2x8x8xf32>, vector<2x8x8xf32> -> vector<2x8x8xf32>
    "tpu.trace_stop"() : () -> ()
    %133 = tpu.concatenate %75, %94, %113, %132 in 2 : vector<2x8x8xf32>, vector<2x8x8xf32>, vector<2x8x8xf32>, vector<2x8x8xf32> -> vector<2x8x32xf32>
    %134 = vector.shape_cast %133 : vector<2x8x32xf32> to vector<16x32xf32>
    %c3 = arith.constant 3 : index
    %c0_52 = arith.constant 0 : index
    %c0_53 = arith.constant 0 : index
    %135 = vector.load %arg5[%c3, %c0_52, %c0_53] : memref<4x32x32xf32, #tpu.memory_space<vmem>>, vector<1x32x32xf32>
    %136 = vector.shape_cast %135 : vector<1x32x32xf32> to vector<32x32xf32>
    %cst_54 = arith.constant dense<0.000000e+00> : vector<16x32xf32>
    %137 = tpu.matmul %134, %136, %cst_54 {dimension_numbers = #tpu.dot_dimension_numbers<[1], [0], [0], [1], [0, 0, 1, 1], [], []>} : vector<16x32xf32>, vector<32x32xf32>, vector<16x32xf32> -> vector<16x32xf32>
    %138 = vector.extract_strided_slice %3 {offsets = [3, 0], sizes = [1, 32], strides = [1, 1]} : vector<9x32xf32> to vector<1x32xf32>
    %139 = vector.broadcast %138 : vector<1x32xf32> to vector<16x32xf32>
    %140 = arith.addf %137, %139 : vector<16x32xf32>
    %141 = arith.addf %0, %140 : vector<16x32xf32>
    %142 = vector.extract_strided_slice %3 {offsets = [6, 0], sizes = [1, 32], strides = [1, 1]} : vector<9x32xf32> to vector<1x32xf32>
    %143 = vector.extract_strided_slice %3 {offsets = [7, 0], sizes = [1, 32], strides = [1, 1]} : vector<9x32xf32> to vector<1x32xf32>
    %cst_55 = arith.constant dense<0.000000e+00> : vector<16xf32>
    %144 = vector.multi_reduction <add>, %141, %cst_55 [1] : vector<16x32xf32> to vector<16xf32>
    %145 = vector.shape_cast %144 : vector<16xf32> to vector<16x1xf32>
    %cst_56 = arith.constant 3.200000e+01 : f32
    %146 = vector.broadcast %cst_56 : f32 to vector<16x1xf32>
    %147 = arith.divf %145, %146 : vector<16x1xf32>
    %148 = vector.broadcast %147 : vector<16x1xf32> to vector<16x32xf32>
    %149 = arith.subf %141, %148 : vector<16x32xf32>
    %150 = arith.mulf %149, %149 : vector<16x32xf32>
    %cst_57 = arith.constant dense<0.000000e+00> : vector<16xf32>
    %151 = vector.multi_reduction <add>, %150, %cst_57 [1] : vector<16x32xf32> to vector<16xf32>
    %152 = vector.shape_cast %151 : vector<16xf32> to vector<16x1xf32>
    %cst_58 = arith.constant 0.0322580636 : f32
    %153 = vector.broadcast %cst_58 : f32 to vector<16x1xf32>
    %154 = arith.mulf %152, %153 : vector<16x1xf32>
    %155 = math.sqrt %154 : vector<16x1xf32>
    %cst_59 = arith.constant 9.99999997E-7 : f32
    %156 = vector.broadcast %cst_59 : f32 to vector<16x1xf32>
    %157 = arith.addf %155, %156 : vector<16x1xf32>
    %cst_60 = arith.constant 1.000000e+00 : f32
    %158 = vector.broadcast %cst_60 : f32 to vector<16x1xf32>
    %159 = arith.divf %158, %157 : vector<16x1xf32>
    %160 = vector.broadcast %147 : vector<16x1xf32> to vector<16x32xf32>
    %161 = arith.subf %141, %160 : vector<16x32xf32>
    %162 = vector.broadcast %142 : vector<1x32xf32> to vector<16x32xf32>
    %163 = arith.mulf %162, %161 : vector<16x32xf32>
    %164 = vector.broadcast %159 : vector<16x1xf32> to vector<16x32xf32>
    %165 = arith.mulf %163, %164 : vector<16x32xf32>
    %166 = vector.broadcast %143 : vector<1x32xf32> to vector<16x32xf32>
    %167 = arith.addf %165, %166 : vector<16x32xf32>
    %c0_61 = arith.constant 0 : index
    %c0_62 = arith.constant 0 : index
    %168 = vector.load %arg7[%c0_61, %c0_62] : memref<32x64xf32, #tpu.memory_space<vmem>>, vector<32x64xf32>
    %cst_63 = arith.constant dense<0.000000e+00> : vector<16x64xf32>
    %169 = tpu.matmul %167, %168, %cst_63 {dimension_numbers = #tpu.dot_dimension_numbers<[1], [0], [0], [1], [0, 0, 1, 1], [], []>} : vector<16x32xf32>, vector<32x64xf32>, vector<16x64xf32> -> vector<16x64xf32>
    %c0_64 = arith.constant 0 : index
    %c0_65 = arith.constant 0 : index
    %170 = vector.load %arg8[%c0_64, %c0_65] : memref<1x64xf32, #tpu.memory_space<vmem>>, vector<1x64xf32>
    %171 = vector.broadcast %170 : vector<1x64xf32> to vector<16x64xf32>
    %172 = arith.addf %169, %171 : vector<16x64xf32>
    %cst_66 = arith.constant 0.000000e+00 : f32
    %173 = vector.broadcast %cst_66 : f32 to vector<16x64xf32>
    %174 = arith.maximumf %172, %173 : vector<16x64xf32>
    %c0_67 = arith.constant 0 : index
    %c0_68 = arith.constant 0 : index
    %175 = vector.load %arg9[%c0_67, %c0_68] : memref<64x32xf32, #tpu.memory_space<vmem>>, vector<64x32xf32>
    %cst_69 = arith.constant dense<0.000000e+00> : vector<16x32xf32>
    %176 = tpu.matmul %174, %175, %cst_69 {dimension_numbers = #tpu.dot_dimension_numbers<[1], [0], [0], [1], [0, 0, 1, 1], [], []>} : vector<16x64xf32>, vector<64x32xf32>, vector<16x32xf32> -> vector<16x32xf32>
    %177 = vector.extract_strided_slice %3 {offsets = [8, 0], sizes = [1, 32], strides = [1, 1]} : vector<9x32xf32> to vector<1x32xf32>
    %178 = vector.broadcast %177 : vector<1x32xf32> to vector<16x32xf32>
    %179 = arith.addf %176, %178 : vector<16x32xf32>
    %180 = arith.addf %141, %179 : vector<16x32xf32>
    %c0_70 = arith.constant 0 : index
    %c0_71 = arith.constant 0 : index
    %181 = vector.load %arg10[%c0_70, %c0_71] : memref<16x32xf32, #tpu.memory_space<vmem>>, vector<16x32xf32>
    tpu.vector_store %arg10[%c0_70, %c0_71], %180 {strides = array<i32>} : memref<16x32xf32, #tpu.memory_space<vmem>>, vector<16x32xf32>,
    return
  }
  func.func @transform_0(%arg0: i32) -> (i32, i32) {
    %c0_i32 = arith.constant 0 : i32
    %c0_i32_0 = arith.constant 0 : i32
    %c0_i32_1 = arith.constant 0 : i32
    return %c0_i32, %c0_i32_0 : i32, i32
  }
  func.func @transform_1(%arg0: i32) -> (i32, i32) {
    %c0_i32 = arith.constant 0 : i32
    %c0_i32_0 = arith.constant 0 : i32
    %c0_i32_1 = arith.constant 0 : i32
    return %c0_i32, %c0_i32_0 : i32, i32
  }
  func.func @transform_2(%arg0: i32) -> (i32, i32) {
    %c0_i32 = arith.constant 0 : i32
    %c0_i32_0 = arith.constant 0 : i32
    %c0_i32_1 = arith.constant 0 : i32
    return %c0_i32, %c0_i32_0 : i32, i32
  }
  func.func @transform_3(%arg0: i32) -> (i32, i32, i32) {
    %c0_i32 = arith.constant 0 : i32
    %c0_i32_0 = arith.constant 0 : i32
    %c0_i32_1 = arith.constant 0 : i32
    %c0_i32_2 = arith.constant 0 : i32
    return %c0_i32, %c0_i32_0, %c0_i32_1 : i32, i32, i32
  }
  func.func @transform_4(%arg0: i32) -> (i32, i32, i32) {
    %c0_i32 = arith.constant 0 : i32
    %c0_i32_0 = arith.constant 0 : i32
    %c0_i32_1 = arith.constant 0 : i32
    %c0_i32_2 = arith.constant 0 : i32
    return %c0_i32, %c0_i32_0, %c0_i32_1 : i32, i32, i32
  }
  func.func @transform_5(%arg0: i32) -> (i32, i32) {
    %c0_i32 = arith.constant 0 : i32
    %c0_i32_0 = arith.constant 0 : i32
    %c0_i32_1 = arith.constant 0 : i32
    return %c0_i32, %c0_i32_0 : i32, i32
  }
  func.func @transform_6(%arg0: i32) -> (i32, i32) {
    %c0_i32 = arith.constant 0 : i32
    %c0_i32_0 = arith.constant 0 : i32
    %c0_i32_1 = arith.constant 0 : i32
    return %c0_i32, %c0_i32_0 : i32, i32
  }
  func.func @transform_7(%arg0: i32) -> (i32, i32) {
    %c0_i32 = arith.constant 0 : i32
    %c0_i32_0 = arith.constant 0 : i32
    %c0_i32_1 = arith.constant 0 : i32
    return %c0_i32, %c0_i32_0 : i32, i32
  }
  func.func @transform_8(%arg0: i32) -> (i32, i32) {
    %c0_i32 = arith.constant 0 : i32
    %c0_i32_0 = arith.constant 0 : i32
    %c0_i32_1 = arith.constant 0 : i32
    return %c0_i32, %c0_i32_0 : i32, i32
  }
  func.func @transform_9(%arg0: i32) -> (i32, i32) {
    %c0_i32 = arith.constant 0 : i32
    %c0_i32_0 = arith.constant 0 : i32
    %c0_i32_1 = arith.constant 0 : i32
    return %c0_i32, %c0_i32_0 : i32, i32
  }
}

</mosaic_0001>

<llo_original>
// kernel: tpu_custom_call.1
$region0: #{tpu_custom_call.1}
  #allocation0 [shape = 'u32[]', space=smem, size = 0x4, offset = 0x4, fixed_abs, tag = 'smem constant byte address 0x4 - core index']
  #allocation1 [shape = 'u32[72,128]{1,0:T(1,128)}', space=vmem, size = 0x9000, scoped, tag = 'internal scratch']
  %s0 = inlined_call_operand.vmem [shape: f32[16,32], index: 0, kind: input, shape index: {}]
  %s1 = inlined_call_operand.vmem [shape: f32[16,32], index: 1, kind: input, shape index: {}]
  %s2 = inlined_call_operand.vmem [shape: f32[16,32], index: 2, kind: input, shape index: {}]
  %s3 = inlined_call_operand.vmem [shape: f32[2,8,8], index: 3, kind: input, shape index: {}]
  %s4 = inlined_call_operand.hbm [shape: f32[4,32,32], index: 4, kind: input, shape index: {}]
  %s5 = inlined_call_operand.hbm [shape: f32[9,32], index: 5, kind: input, shape index: {}]
  %s6 = inlined_call_operand.vmem [shape: f32[32,64], index: 6, kind: input, shape index: {}]
  %s7 = inlined_call_operand.vmem [shape: f32[1,64], index: 7, kind: input, shape index: {}]
  %s8 = inlined_call_operand.vmem [shape: f32[64,32], index: 8, kind: input, shape index: {}]
  %s9 = inlined_call_operand.hbm [shape: f32[16,32], index: 9, kind: output, shape index: {}]
  %s10 = sld [smem:[#allocation0]]
  $region54: #{tpu_custom_call.1} parent=0
    _
  %s12 = ssub.s32 1, %s10
  %s13 = scalar_select 0, %s12, %s10
  $region1: #{tpu_custom_call.1} parent=0
    #allocation2 [shape = 'u8[65536]{0}', space=vmem, size = 0x10000, scoped, tag = 'input window, operand 4, single buffered']
    #allocation3 [shape = 's32[1]{0}', space=sflag, size = 0x4, scoped, tag = 'scoped memory for tpu_custom_call.1']
    #allocation4 [shape = 's32[1]{0}', space=sflag, size = 0x4, scoped, tag = 'scoped memory for tpu_custom_call.1']
    #allocation5 [shape = 'u8[8192]{0}', space=vmem, size = 0x2000, scoped, tag = 'input window, operand 5, single buffered']
    #allocation6 [shape = 's32[1]{0}', space=sflag, size = 0x4, scoped, tag = 'scoped memory for tpu_custom_call.1']
    #allocation7 [shape = 'u8[8192]{0}', space=vmem, size = 0x2000, scoped, tag = 'output window, operand 0, single buffered']
    %14 = vsyncpa [#allocation3], 0
    %15 = vsyncpa [#allocation6], 0
    %16 = vsyncpa [#allocation4], 0
    // Predicated region
    $region2: #{tpu_custom_call.1} parent=1 // pred_check
      _
    $region3: #{tpu_custom_call.1} parent=1 // pred_check_branch
      %18 = sbr.rel (0) target = $region5
    $region4: #{tpu_custom_call.1} parent=1 // pred_region
      _
    $region5: #{tpu_custom_call.1} parent=1 // pred_fallthru
      _
    // Predicated region
    $region6: #{tpu_custom_call.1} parent=1 // pred_check
      _
    $region7: #{tpu_custom_call.1} parent=1 // pred_check_branch
      %20 = sbr.rel (0) target = $region9
    $region8: #{tpu_custom_call.1} parent=1 // pred_region
      _
    $region9: #{tpu_custom_call.1} parent=1 // pred_fallthru
      _
    // Predicated region
    $region10: #{tpu_custom_call.1} parent=1 // pred_check
      _
    $region11: #{tpu_custom_call.1} parent=1 // pred_check_branch
      %22 = sbr.rel (0) target = $region13
    $region12: #{tpu_custom_call.1} parent=1 // pred_region
      _
    $region13: #{tpu_custom_call.1} parent=1 // pred_fallthru
      _
    // Predicated region
    $region14: #{tpu_custom_call.1} parent=1 // pred_check
      _
    $region15: #{tpu_custom_call.1} parent=1 // pred_check_branch
      %24 = sbr.rel (0) target = $region17
    $region16: #{tpu_custom_call.1} parent=1 // pred_region
      _
    $region17: #{tpu_custom_call.1} parent=1 // pred_fallthru
      _
    // Predicated region
    $region18: #{tpu_custom_call.1} parent=1 // pred_check
      _
    $region19: #{tpu_custom_call.1} parent=1 // pred_check_branch
      %26 = sbr.rel (0) target = $region21
    $region20: #{tpu_custom_call.1} parent=1 // pred_region
      %28 = vsyncadd [#allocation3], 0
      %s29 = sshll.u32 %s4, 4
      %s30 = int_to_ptr.hbm [resolvable:$true] %s29
      %s31 = sshll.u32 [#allocation2], 4
      %s32 = int_to_ptr.vmem [resolvable:$true] %s31
      %37 = dma.hbm_to_vmem [thread:$0]  %s30, 2048, %s32, [#allocation3], 128, 128, 8
    $region21: #{tpu_custom_call.1} parent=1 // pred_fallthru
      _
    // Predicated region
    $region22: #{tpu_custom_call.1} parent=1 // pred_check
      _
    $region23: #{tpu_custom_call.1} parent=1 // pred_check_branch
      %39 = sbr.rel (0) target = $region25
    $region24: #{tpu_custom_call.1} parent=1 // pred_region
      %41 = vsyncadd [#allocation6], 0
      %s42 = sshll.u32 %s5, 4
      %s43 = int_to_ptr.hbm [resolvable:$true] %s42
      %s44 = sshll.u32 [#allocation5], 4
      %s45 = int_to_ptr.vmem [resolvable:$true] %s44
      %50 = dma.hbm_to_vmem [thread:$0]  %s43, 256, %s45, [#allocation6], 128, 128, 8
    $region25: #{tpu_custom_call.1} parent=1 // pred_fallthru
      _
    // Predicated region
    $region26: #{tpu_custom_call.1} parent=1 // pred_check
      _
    $region27: #{tpu_custom_call.1} parent=1 // pred_check_branch
      %52 = sbr.rel (0) target = $region29
    $region28: #{tpu_custom_call.1} parent=1 // pred_region
      _
    $region29: #{tpu_custom_call.1} parent=1 // pred_fallthru
      _
    // Predicated region
    $region30: #{tpu_custom_call.1} parent=1 // pred_check
      _
    $region31: #{tpu_custom_call.1} parent=1 // pred_check_branch
      %54 = sbr.rel (0) target = $region33
    $region32: #{tpu_custom_call.1} parent=1 // pred_region
      _
    $region33: #{tpu_custom_call.1} parent=1 // pred_fallthru
      _
    // Predicated region
    $region34: #{tpu_custom_call.1} parent=1 // pred_check
      _
    $region35: #{tpu_custom_call.1} parent=1 // pred_check_branch
      %56 = sbr.rel (0) target = $region37
    $region36: #{tpu_custom_call.1} parent=1 // pred_region
      _
    $region37: #{tpu_custom_call.1} parent=1 // pred_fallthru
      _
    // Predicated region
    $region38: #{tpu_custom_call.1} parent=1 // pred_check
      _
    $region39: #{tpu_custom_call.1} parent=1 // pred_check_branch
      %58 = sbr.rel (0) target = $region41
    $region40: #{tpu_custom_call.1} parent=1 // pred_region
      %60 = dma.done [#allocation3], 2048
    $region41: #{tpu_custom_call.1} parent=1 // pred_fallthru
      _
    // Predicated region
    $region42: #{tpu_custom_call.1} parent=1 // pred_check
      _
    $region43: #{tpu_custom_call.1} parent=1 // pred_check_branch
      %62 = sbr.rel (0) target = $region45
    $region44: #{tpu_custom_call.1} parent=1 // pred_region
      %64 = dma.done [#allocation6], 256
    $region45: #{tpu_custom_call.1} parent=1 // pred_fallthru
      _
    %v65 = vld [vmem:[%s0] sm:$0xff]
    %v66 = vld [vmem:[%s0 + $0x8] sm:$0xff]
    %v67 = vld [vmem:[%s1] sm:$0xff]
    %v68 = vld [vmem:[%s1 + $0x8] sm:$0xff]
    %v69 = vld [vmem:[%s2] sm:$0xff]
    %v70 = vld [vmem:[%s2 + $0x8] sm:$0xff]
    %v71 = vld [vmem:[#allocation5] sm:$0xff]
    %v72 = vld [vmem:[#allocation5 + $0x8] sm:$0x1]
    %vm73 = vcmask 261120
    %v74 = vsel %vm73, %v65, 0.0
    %75 = vadd.xlane.f32.xlu0 %v74
    %v76 = vpop.xlane.xlu0 %75
    %v77 = vsel %vm73, %v66, 0.0
    %78 = vadd.xlane.f32.xlu0 %v77
    %v79 = vpop.xlane.xlu0 %78
    %v80 = vrcp.pop 32.0
    %v81 = vmul.f32 32.0, %v80
    %v82 = vsub.f32 1.0, %v81
    %v83 = vmul.f32 %v80, %v82
    %v84 = vadd.f32 %v80, %v83
    %vm85 = vweird.f32 %v80
    %v86 = vsel %vm85, %v80, %v84
    %v87 = vmul.f32 %v76, %v86
    %v88 = vmul.f32 %v79, %v86
    %v89 = vsub.f32 %v65, %v87
    %v90 = vsub.f32 %v66, %v88
    %v91 = vmul.f32 %v89, %v89
    %v92 = vmul.f32 %v90, %v90
    %v93 = vsel %vm73, %v91, 0.0
    %94 = vadd.xlane.f32.xlu0 %v93
    %v95 = vpop.xlane.xlu0 %94
    %v96 = vsel %vm73, %v92, 0.0
    %97 = vadd.xlane.f32.xlu0 %v96
    %v98 = vpop.xlane.xlu0 %97
    %v99 = vmul.f32 %v95, 0.032258064
    %v100 = vmul.f32 %v98, 0.032258064
    %v101 = vrsqrt.pop %v99
    %v102 = vmul.f32 %v101, %v99
    %v103 = vmul.f32 %v102, %v101
    %v104 = vmul.f32 0.5, %v103
    %v105 = vsub.f32 1.5, %v104
    %v106 = vmul.f32 %v101, %v105
    %v107 = vmul.f32 %v99, %v106
    %vm108 = vcmp.eq.f32.partialorder %v99, inf
    %v109 = vsel %vm108, %v99, %v107
    %vm110 = vcmp.eq.f32.partialorder %v99, 0.0
    %v111 = vand.u32 %v99, 2147483648
    %v112 = vsel %vm110, %v111, %v109
    %v113 = vrsqrt.pop %v100
    %v114 = vmul.f32 %v113, %v100
    %v115 = vmul.f32 %v114, %v113
    %v116 = vmul.f32 0.5, %v115
    %v117 = vsub.f32 1.5, %v116
    %v118 = vmul.f32 %v113, %v117
    %v119 = vmul.f32 %v100, %v118
    %vm120 = vcmp.eq.f32.partialorder %v100, inf
    %v121 = vsel %vm120, %v100, %v119
    %vm122 = vcmp.eq.f32.partialorder %v100, 0.0
    %v123 = vand.u32 %v100, 2147483648
    %v124 = vsel %vm122, %v123, %v121
    %v125 = vadd.f32 %v112, 1e-06
    %v126 = vadd.f32 %v124, 1e-06
    %v127 = vrcp.pop %v125
    %v128 = vmul.f32 %v125, %v127
    %v129 = vsub.f32 1.0, %v128
    %v130 = vmul.f32 %v127, %v129
    %v131 = vadd.f32 %v127, %v130
    %vm132 = vweird.f32 %v125
    %vm133 = vweird.f32 %v127
    %vm134 = vmor %vm132, %vm133
    %v135 = vsel %vm134, %v127, %v131
    %v136 = vand.u32 2147483647, %v125
    %vm137 = vcmp.eq.f32.partialorder %v136, 8.507059e+37
    %v138 = vand.u32 %v125, 2147483648
    %v139 = vor.u32 1.1754944e-38, %v138
    %v140 = vsel %vm137, %v139, %v135
    %v141 = vmul.f32 1.0, %v140
    %v142 = vrcp.pop %v126
    %v143 = vmul.f32 %v126, %v142
    %v144 = vsub.f32 1.0, %v143
    %v145 = vmul.f32 %v142, %v144
    %v146 = vadd.f32 %v142, %v145
    %vm147 = vweird.f32 %v126
    %vm148 = vweird.f32 %v142
    %vm149 = vmor %vm147, %vm148
    %v150 = vsel %vm149, %v142, %v146
    %v151 = vand.u32 2147483647, %v126
    %vm152 = vcmp.eq.f32.partialorder %v151, 8.507059e+37
    %v153 = vand.u32 %v126, 2147483648
    %v154 = vor.u32 1.1754944e-38, %v153
    %v155 = vsel %vm152, %v154, %v150
    %v156 = vmul.f32 1.0, %v155
    %v157 = vperm.slane %v71, 4
    %v158 = vmul.f32 %v157, %v89
    %v159 = vmul.f32 %v157, %v90
    %v160 = vmul.f32 %v158, %v141
    %v161 = vmul.f32 %v159, %v156
    %v162 = vperm.slane %v71, 5
    %v163 = vadd.f32 %v160, %v162
    %v164 = vadd.f32 %v161, %v162
    %v165 = vld [vmem:[#allocation2] sm:$0xff]
    %v166 = vld [vmem:[#allocation2 + $0x8] sm:$0xff]
    %v167 = vld [vmem:[#allocation2 + $0x10] sm:$0xff]
    %v168 = vld [vmem:[#allocation2 + $0x18] sm:$0xff]
    %v169 = vperm.slane %v71, 0
    %v171 = vsel %vm73, %v163, 0
    %v174 = vsel %vm73, %v164, 0
    %176 = vmatpush.msra.mxu0 0.0
    %177 = vmatpush.msra.mxu0 0.0
    %178 = vmatpush.msra.mxu0 0.0
    %179 = vmatpush.msra.mxu0 0.0
    %180 = vmatpush.msra.mxu0 0.0
    %181 = vmatpush.msra.mxu0 0.0
    %182 = vmatpush.msra.mxu0 0.0
    %183 = vmatpush.msra.mxu0 0.0
    %184 = vmatpush.msra.mxu0 0.0
    %185 = vmatpush.msra.mxu0 0.0
    %186 = vmatpush.msra.mxu0 0.0
    %187 = vmatpush.msra.mxu0 0.0
    %188 = vmatpush.msra.mxu0 %v168
    %189 = vmatpush.msra.mxu0 %v167
    %190 = vmatpush.msra.mxu0 %v166
    %191 = vmatpush.msra.mxu0 %v165
    %192 = vmatmul.f32.gmra.mxu0 %v171
    %v193 = vpop.f32.mrf.mxu0
    %v194 = vadd.f32 %v169, %v193
    %195 = vmatmul.f32.gmra.mxu0 %v174
    %v196 = vpop.f32.mrf.mxu0
    %v197 = vadd.f32 %v169, %v196
    %198 = vdwg.mxu0
    %s199 = scalar_lea.vmem [#allocation2], 32
    %v200 = vld [vmem:[%s199] sm:$0xff]
    %v201 = vld [vmem:[%s199 + $0x8] sm:$0xff]
    %v202 = vld [vmem:[%s199 + $0x10] sm:$0xff]
    %v203 = vld [vmem:[%s199 + $0x18] sm:$0xff]
    %v204 = vperm.slane %v71, 1
    %v206 = vsel %vm73, %v67, 0
    %v209 = vsel %vm73, %v68, 0
    %211 = vmatpush.msra.mxu0 0.0
    %212 = vmatpush.msra.mxu0 0.0
    %213 = vmatpush.msra.mxu0 0.0
    %214 = vmatpush.msra.mxu0 0.0
    %215 = vmatpush.msra.mxu0 0.0
    %216 = vmatpush.msra.mxu0 0.0
    %217 = vmatpush.msra.mxu0 0.0
    %218 = vmatpush.msra.mxu0 0.0
    %219 = vmatpush.msra.mxu0 0.0
    %220 = vmatpush.msra.mxu0 0.0
    %221 = vmatpush.msra.mxu0 0.0
    %222 = vmatpush.msra.mxu0 0.0
    %223 = vmatpush.msra.mxu0 %v203
    %224 = vmatpush.msra.mxu0 %v202
    %225 = vmatpush.msra.mxu0 %v201
    %226 = vmatpush.msra.mxu0 %v200
    %227 = vmatmul.f32.gmra.mxu0 %v206
    %v228 = vpop.f32.mrf.mxu0
    %v229 = vadd.f32 %v204, %v228
    %230 = vmatmul.f32.gmra.mxu0 %v209
    %v231 = vpop.f32.mrf.mxu0
    %v232 = vadd.f32 %v204, %v231
    %233 = vdwg.mxu0
    %s234 = scalar_lea.vmem [#allocation2], 64
    %v235 = vld [vmem:[%s234] sm:$0xff]
    %v236 = vld [vmem:[%s234 + $0x8] sm:$0xff]
    %v237 = vld [vmem:[%s234 + $0x10] sm:$0xff]
    %v238 = vld [vmem:[%s234 + $0x18] sm:$0xff]
    %v239 = vperm.slane %v71, 2
    %v241 = vsel %vm73, %v69, 0
    %v244 = vsel %vm73, %v70, 0
    %246 = vmatpush.msra.mxu0 0.0
    %247 = vmatpush.msra.mxu0 0.0
    %248 = vmatpush.msra.mxu0 0.0
    %249 = vmatpush.msra.mxu0 0.0
    %250 = vmatpush.msra.mxu0 0.0
    %251 = vmatpush.msra.mxu0 0.0
    %252 = vmatpush.msra.mxu0 0.0
    %253 = vmatpush.msra.mxu0 0.0
    %254 = vmatpush.msra.mxu0 0.0
    %255 = vmatpush.msra.mxu0 0.0
    %256 = vmatpush.msra.mxu0 0.0
    %257 = vmatpush.msra.mxu0 0.0
    %258 = vmatpush.msra.mxu0 %v238
    %259 = vmatpush.msra.mxu0 %v237
    %260 = vmatpush.msra.mxu0 %v236
    %261 = vmatpush.msra.mxu0 %v235
    %262 = vmatmul.f32.gmra.mxu0 %v241
    %v263 = vpop.f32.mrf.mxu0
    %v264 = vadd.f32 %v239, %v263
    %265 = vmatmul.f32.gmra.mxu0 %v244
    %v266 = vpop.f32.mrf.mxu0
    %v267 = vadd.f32 %v239, %v266
    %268 = vdwg.mxu0
    %v269 = vld [vmem:[%s3] sm:$0xff]
    %v270 = vld [vmem:[%s3 + $0x8] sm:$0xff]
    %vm271 = vcmp.eq.f32.partialorder %v269, 0.0
    %vm272 = vcmp.eq.f32.partialorder %v270, 0.0
    %v273 = vsel %vm271, -1e+09, 0.0
    %v274 = vsel %vm272, -1e+09, 0.0
    %vm275 = vcmask 64512
    %v277 = vsel %vm275, %v194, 0
    %v280 = vsel %vm275, %v229, 0
    %282 = vmatpush.xpose.msra.mxu0 0.0
    %283 = vmatpush.xpose.msra.mxu0 0.0
    %284 = vmatpush.xpose.msra.mxu0 0.0
    %285 = vmatpush.xpose.msra.mxu0 0.0
    %286 = vmatpush.xpose.msra.mxu0 0.0
    %287 = vmatpush.xpose.msra.mxu0 0.0
    %288 = vmatpush.xpose.msra.mxu0 0.0
    %289 = vmatpush.xpose.msra.mxu0 0.0
    %290 = vmatpush.xpose.msra.mxu0 0.0
    %291 = vmatpush.xpose.msra.mxu0 0.0
    %292 = vmatpush.xpose.msra.mxu0 0.0
    %293 = vmatpush.xpose.msra.mxu0 0.0
    %294 = vmatpush.xpose.msra.mxu0 0.0
    %295 = vmatpush.xpose.msra.mxu0 0.0
    %296 = vmatpush.xpose.msra.mxu0 0.0
    %297 = vmatpush.xpose.msra.mxu0 %v280
    %298 = vmatmul.f32.gmra.mxu0 %v277
    %v299 = vpop.f32.mrf.mxu0
    %v300 = vadd.f32 0.0, %v299
    %301 = vdwg.mxu0
    %v303 = vsel %vm275, %v197, 0
    %v306 = vsel %vm275, %v232, 0
    %308 = vmatpush.xpose.msra.mxu0 0.0
    %309 = vmatpush.xpose.msra.mxu0 0.0
    %310 = vmatpush.xpose.msra.mxu0 0.0
    %311 = vmatpush.xpose.msra.mxu0 0.0
    %312 = vmatpush.xpose.msra.mxu0 0.0
    %313 = vmatpush.xpose.msra.mxu0 0.0
    %314 = vmatpush.xpose.msra.mxu0 0.0
    %315 = vmatpush.xpose.msra.mxu0 0.0
    %316 = vmatpush.xpose.msra.mxu0 0.0
    %317 = vmatpush.xpose.msra.mxu0 0.0
    %318 = vmatpush.xpose.msra.mxu0 0.0
    %319 = vmatpush.xpose.msra.mxu0 0.0
    %320 = vmatpush.xpose.msra.mxu0 0.0
    %321 = vmatpush.xpose.msra.mxu0 0.0
    %322 = vmatpush.xpose.msra.mxu0 0.0
    %323 = vmatpush.xpose.msra.mxu0 %v306
    %324 = vmatmul.f32.gmra.mxu0 %v303
    %v325 = vpop.f32.mrf.mxu0
    %v326 = vadd.f32 0.0, %v325
    %327 = vdwg.mxu0
    %v328 = vmul.f32 %v300, 0.35355338
    %v329 = vmul.f32 %v326, 0.35355338
    %v330 = vadd.f32 %v328, %v273
    %v331 = vadd.f32 %v329, %v274
    %v332 = vsel %vm275, %v330, -inf
    %333 = vmax.xlane.f32.xlu0 %v332
    %v334 = vpop.xlane.xlu0 %333
    %v335 = vsel %vm275, %v331, -inf
    %336 = vmax.xlane.f32.xlu0 %v335
    %v337 = vpop.xlane.xlu0 %336
    %v338 = vsub.f32 %v330, %v334
    %v339 = vsub.f32 %v331, %v337
    %v340 = vmul.f32 %v338, 1.442695
    %v341 = vpow.pop %v340
    %v342 = vmul.f32 %v339, 1.442695
    %v343 = vpow.pop %v342
    %v344 = vsel %vm275, %v341, 0.0
    %345 = vadd.xlane.f32.xlu0 %v344
    %v346 = vpop.xlane.xlu0 %345
    %v347 = vsel %vm275, %v343, 0.0
    %348 = vadd.xlane.f32.xlu0 %v347
    %v349 = vpop.xlane.xlu0 %348
    %v350 = vrcp.pop %v346
    %v351 = vmul.f32 %v346, %v350
    %v352 = vsub.f32 1.0, %v351
    %v353 = vmul.f32 %v350, %v352
    %v354 = vadd.f32 %v350, %v353
    %vm355 = vweird.f32 %v346
    %vm356 = vweird.f32 %v350
    %vm357 = vmor %vm355, %vm356
    %v358 = vsel %vm357, %v350, %v354
    %v359 = vand.u32 2147483647, %v346
    %vm360 = vcmp.eq.f32.partialorder %v359, 8.507059e+37
    %v361 = vand.u32 %v346, 2147483648
    %v362 = vor.u32 1.1754944e-38, %v361
    %v363 = vsel %vm360, %v362, %v358
    %v364 = vmul.f32 1.0, %v363
    %v365 = vrcp.pop %v349
    %v366 = vmul.f32 %v349, %v365
    %v367 = vsub.f32 1.0, %v366
    %v368 = vmul.f32 %v365, %v367
    %v369 = vadd.f32 %v365, %v368
    %vm370 = vweird.f32 %v349
    %vm371 = vweird.f32 %v365
    %vm372 = vmor %vm370, %vm371
    %v373 = vsel %vm372, %v365, %v369
    %v374 = vand.u32 2147483647, %v349
    %vm375 = vcmp.eq.f32.partialorder %v374, 8.507059e+37
    %v376 = vand.u32 %v349, 2147483648
    %v377 = vor.u32 1.1754944e-38, %v376
    %v378 = vsel %vm375, %v377, %v373
    %v379 = vmul.f32 1.0, %v378
    %v380 = vmul.f32 %v341, %v364
    %v381 = vmul.f32 %v343, %v379
    %v383 = vsel %vm275, %v380, 0
    %385 = vmatpush.msra.mxu0 0.0
    %386 = vmatpush.msra.mxu0 0.0
    %387 = vmatpush.msra.mxu0 0.0
    %388 = vmatpush.msra.mxu0 0.0
    %389 = vmatpush.msra.mxu0 0.0
    %390 = vmatpush.msra.mxu0 0.0
    %391 = vmatpush.msra.mxu0 0.0
    %392 = vmatpush.msra.mxu0 0.0
    %393 = vmatpush.msra.mxu0 0.0
    %394 = vmatpush.msra.mxu0 0.0
    %395 = vmatpush.msra.mxu0 0.0
    %396 = vmatpush.msra.mxu0 0.0
    %397 = vmatpush.msra.mxu0 0.0
    %398 = vmatpush.msra.mxu0 0.0
    %399 = vmatpush.msra.mxu0 0.0
    %400 = vmatpush.msra.mxu0 %v264
    %401 = vmatmul.f32.gmra.mxu0 %v383
    %v402 = vpop.f32.mrf.mxu0
    %v403 = vadd.f32 0.0, %v402
    %404 = vdwg.mxu0
    %v406 = vsel %vm275, %v381, 0
    %408 = vmatpush.msra.mxu0 0.0
    %409 = vmatpush.msra.mxu0 0.0
    %410 = vmatpush.msra.mxu0 0.0
    %411 = vmatpush.msra.mxu0 0.0
    %412 = vmatpush.msra.mxu0 0.0
    %413 = vmatpush.msra.mxu0 0.0
    %414 = vmatpush.msra.mxu0 0.0
    %415 = vmatpush.msra.mxu0 0.0
    %416 = vmatpush.msra.mxu0 0.0
    %417 = vmatpush.msra.mxu0 0.0
    %418 = vmatpush.msra.mxu0 0.0
    %419 = vmatpush.msra.mxu0 0.0
    %420 = vmatpush.msra.mxu0 0.0
    %421 = vmatpush.msra.mxu0 0.0
    %422 = vmatpush.msra.mxu0 0.0
    %423 = vmatpush.msra.mxu0 %v267
    %424 = vmatmul.f32.gmra.mxu0 %v406
    %v425 = vpop.f32.mrf.mxu0
    %v426 = vadd.f32 0.0, %v425
    %427 = vdwg.mxu0
    %428 = vrot.lane.b32.xlu0 %v194, 120
    %v429 = vpop.permute.xlu0 %428
    %430 = vrot.lane.b32.xlu0 %v229, 120
    %v431 = vpop.permute.xlu0 %430
    %v432 = vsel %vm275, %v429, 0
    %v434 = vsel %vm275, %v431, 0
    %436 = vmatpush.xpose.msra.mxu0 0.0
    %437 = vmatpush.xpose.msra.mxu0 0.0
    %438 = vmatpush.xpose.msra.mxu0 0.0
    %439 = vmatpush.xpose.msra.mxu0 0.0
    %440 = vmatpush.xpose.msra.mxu0 0.0
    %441 = vmatpush.xpose.msra.mxu0 0.0
    %442 = vmatpush.xpose.msra.mxu0 0.0
    %443 = vmatpush.xpose.msra.mxu0 0.0
    %444 = vmatpush.xpose.msra.mxu0 0.0
    %445 = vmatpush.xpose.msra.mxu0 0.0
    %446 = vmatpush.xpose.msra.mxu0 0.0
    %447 = vmatpush.xpose.msra.mxu0 0.0
    %448 = vmatpush.xpose.msra.mxu0 0.0
    %449 = vmatpush.xpose.msra.mxu0 0.0
    %450 = vmatpush.xpose.msra.mxu0 0.0
    %451 = vmatpush.xpose.msra.mxu0 %v434
    %452 = vmatmul.f32.gmra.mxu0 %v432
    %v453 = vpop.f32.mrf.mxu0
    %v454 = vadd.f32 0.0, %v453
    %455 = vdwg.mxu0
    %456 = vrot.lane.b32.xlu0 %v197, 120
    %v457 = vpop.permute.xlu0 %456
    %458 = vrot.lane.b32.xlu0 %v232, 120
    %v459 = vpop.permute.xlu0 %458
    %v460 = vsel %vm275, %v457, 0
    %v462 = vsel %vm275, %v459, 0
    %464 = vmatpush.xpose.msra.mxu0 0.0
    %465 = vmatpush.xpose.msra.mxu0 0.0
    %466 = vmatpush.xpose.msra.mxu0 0.0
    %467 = vmatpush.xpose.msra.mxu0 0.0
    %468 = vmatpush.xpose.msra.mxu0 0.0
    %469 = vmatpush.xpose.msra.mxu0 0.0
    %470 = vmatpush.xpose.msra.mxu0 0.0
    %471 = vmatpush.xpose.msra.mxu0 0.0
    %472 = vmatpush.xpose.msra.mxu0 0.0
    %473 = vmatpush.xpose.msra.mxu0 0.0
    %474 = vmatpush.xpose.msra.mxu0 0.0
    %475 = vmatpush.xpose.msra.mxu0 0.0
    %476 = vmatpush.xpose.msra.mxu0 0.0
    %477 = vmatpush.xpose.msra.mxu0 0.0
    %478 = vmatpush.xpose.msra.mxu0 0.0
    %479 = vmatpush.xpose.msra.mxu0 %v462
    %480 = vmatmul.f32.gmra.mxu0 %v460
    %v481 = vpop.f32.mrf.mxu0
    %v482 = vadd.f32 0.0, %v481
    %483 = vdwg.mxu0
    %v484 = vmul.f32 %v454, 0.35355338
    %v485 = vmul.f32 %v482, 0.35355338
    %v486 = vadd.f32 %v484, %v273
    %v487 = vadd.f32 %v485, %v274
    %v488 = vsel %vm275, %v486, -inf
    %489 = vmax.xlane.f32.xlu0 %v488
    %v490 = vpop.xlane.xlu0 %489
    %v491 = vsel %vm275, %v487, -inf
    %492 = vmax.xlane.f32.xlu0 %v491
    %v493 = vpop.xlane.xlu0 %492
    %v494 = vsub.f32 %v486, %v490
    %v495 = vsub.f32 %v487, %v493
    %v496 = vmul.f32 %v494, 1.442695
    %v497 = vpow.pop %v496
    %v498 = vmul.f32 %v495, 1.442695
    %v499 = vpow.pop %v498
    %v500 = vsel %vm275, %v497, 0.0
    %501 = vadd.xlane.f32.xlu0 %v500
    %v502 = vpop.xlane.xlu0 %501
    %v503 = vsel %vm275, %v499, 0.0
    %504 = vadd.xlane.f32.xlu0 %v503
    %v505 = vpop.xlane.xlu0 %504
    %v506 = vrcp.pop %v502
    %v507 = vmul.f32 %v502, %v506
    %v508 = vsub.f32 1.0, %v507
    %v509 = vmul.f32 %v506, %v508
    %v510 = vadd.f32 %v506, %v509
    %vm511 = vweird.f32 %v502
    %vm512 = vweird.f32 %v506
    %vm513 = vmor %vm511, %vm512
    %v514 = vsel %vm513, %v506, %v510
    %v515 = vand.u32 2147483647, %v502
    %vm516 = vcmp.eq.f32.partialorder %v515, 8.507059e+37
    %v517 = vand.u32 %v502, 2147483648
    %v518 = vor.u32 1.1754944e-38, %v517
    %v519 = vsel %vm516, %v518, %v514
    %v520 = vmul.f32 1.0, %v519
    %v521 = vrcp.pop %v505
    %v522 = vmul.f32 %v505, %v521
    %v523 = vsub.f32 1.0, %v522
    %v524 = vmul.f32 %v521, %v523
    %v525 = vadd.f32 %v521, %v524
    %vm526 = vweird.f32 %v505
    %vm527 = vweird.f32 %v521
    %vm528 = vmor %vm526, %vm527
    %v529 = vsel %vm528, %v521, %v525
    %v530 = vand.u32 2147483647, %v505
    %vm531 = vcmp.eq.f32.partialorder %v530, 8.507059e+37
    %v532 = vand.u32 %v505, 2147483648
    %v533 = vor.u32 1.1754944e-38, %v532
    %v534 = vsel %vm531, %v533, %v529
    %v535 = vmul.f32 1.0, %v534
    %v536 = vmul.f32 %v497, %v520
    %v537 = vmul.f32 %v499, %v535
    %539 = vrot.lane.b32.xlu0 %v264, 120
    %v540 = vpop.permute.xlu0 %539
    %v543 = vsel %vm275, %v536, 0
    %545 = vmatpush.msra.mxu0 0.0
    %546 = vmatpush.msra.mxu0 0.0
    %547 = vmatpush.msra.mxu0 0.0
    %548 = vmatpush.msra.mxu0 0.0
    %549 = vmatpush.msra.mxu0 0.0
    %550 = vmatpush.msra.mxu0 0.0
    %551 = vmatpush.msra.mxu0 0.0
    %552 = vmatpush.msra.mxu0 0.0
    %553 = vmatpush.msra.mxu0 0.0
    %554 = vmatpush.msra.mxu0 0.0
    %555 = vmatpush.msra.mxu0 0.0
    %556 = vmatpush.msra.mxu0 0.0
    %557 = vmatpush.msra.mxu0 0.0
    %558 = vmatpush.msra.mxu0 0.0
    %559 = vmatpush.msra.mxu0 0.0
    %560 = vmatpush.msra.mxu0 %v540
    %561 = vmatmul.f32.gmra.mxu0 %v543
    %v562 = vpop.f32.mrf.mxu0
    %v563 = vadd.f32 0.0, %v562
    %564 = vdwg.mxu0
    %566 = vrot.lane.b32.xlu0 %v267, 120
    %v567 = vpop.permute.xlu0 %566
    %v570 = vsel %vm275, %v537, 0
    %572 = vmatpush.msra.mxu0 0.0
    %573 = vmatpush.msra.mxu0 0.0
    %574 = vmatpush.msra.mxu0 0.0
    %575 = vmatpush.msra.mxu0 0.0
    %576 = vmatpush.msra.mxu0 0.0
    %577 = vmatpush.msra.mxu0 0.0
    %578 = vmatpush.msra.mxu0 0.0
    %579 = vmatpush.msra.mxu0 0.0
    %580 = vmatpush.msra.mxu0 0.0
    %581 = vmatpush.msra.mxu0 0.0
    %582 = vmatpush.msra.mxu0 0.0
    %583 = vmatpush.msra.mxu0 0.0
    %584 = vmatpush.msra.mxu0 0.0
    %585 = vmatpush.msra.mxu0 0.0
    %586 = vmatpush.msra.mxu0 0.0
    %587 = vmatpush.msra.mxu0 %v567
    %588 = vmatmul.f32.gmra.mxu0 %v570
    %v589 = vpop.f32.mrf.mxu0
    %v590 = vadd.f32 0.0, %v589
    %591 = vdwg.mxu0
    %592 = vrot.lane.b32.xlu0 %v194, 112
    %v593 = vpop.permute.xlu0 %592
    %594 = vrot.lane.b32.xlu0 %v229, 112
    %v595 = vpop.permute.xlu0 %594
    %v596 = vsel %vm275, %v593, 0
    %v598 = vsel %vm275, %v595, 0
    %600 = vmatpush.xpose.msra.mxu0 0.0
    %601 = vmatpush.xpose.msra.mxu0 0.0
    %602 = vmatpush.xpose.msra.mxu0 0.0
    %603 = vmatpush.xpose.msra.mxu0 0.0
    %604 = vmatpush.xpose.msra.mxu0 0.0
    %605 = vmatpush.xpose.msra.mxu0 0.0
    %606 = vmatpush.xpose.msra.mxu0 0.0
    %607 = vmatpush.xpose.msra.mxu0 0.0
    %608 = vmatpush.xpose.msra.mxu0 0.0
    %609 = vmatpush.xpose.msra.mxu0 0.0
    %610 = vmatpush.xpose.msra.mxu0 0.0
    %611 = vmatpush.xpose.msra.mxu0 0.0
    %612 = vmatpush.xpose.msra.mxu0 0.0
    %613 = vmatpush.xpose.msra.mxu0 0.0
    %614 = vmatpush.xpose.msra.mxu0 0.0
    %615 = vmatpush.xpose.msra.mxu0 %v598
    %616 = vmatmul.f32.gmra.mxu0 %v596
    %v617 = vpop.f32.mrf.mxu0
    %v618 = vadd.f32 0.0, %v617
    %619 = vdwg.mxu0
    %620 = vrot.lane.b32.xlu0 %v197, 112
    %v621 = vpop.permute.xlu0 %620
    %622 = vrot.lane.b32.xlu0 %v232, 112
    %v623 = vpop.permute.xlu0 %622
    %v624 = vsel %vm275, %v621, 0
    %v626 = vsel %vm275, %v623, 0
    %628 = vmatpush.xpose.msra.mxu0 0.0
    %629 = vmatpush.xpose.msra.mxu0 0.0
    %630 = vmatpush.xpose.msra.mxu0 0.0
    %631 = vmatpush.xpose.msra.mxu0 0.0
    %632 = vmatpush.xpose.msra.mxu0 0.0
    %633 = vmatpush.xpose.msra.mxu0 0.0
    %634 = vmatpush.xpose.msra.mxu0 0.0
    %635 = vmatpush.xpose.msra.mxu0 0.0
    %636 = vmatpush.xpose.msra.mxu0 0.0
    %637 = vmatpush.xpose.msra.mxu0 0.0
    %638 = vmatpush.xpose.msra.mxu0 0.0
    %639 = vmatpush.xpose.msra.mxu0 0.0
    %640 = vmatpush.xpose.msra.mxu0 0.0
    %641 = vmatpush.xpose.msra.mxu0 0.0
    %642 = vmatpush.xpose.msra.mxu0 0.0
    %643 = vmatpush.xpose.msra.mxu0 %v626
    %644 = vmatmul.f32.gmra.mxu0 %v624
    %v645 = vpop.f32.mrf.mxu0
    %v646 = vadd.f32 0.0, %v645
    %647 = vdwg.mxu0
    %v648 = vmul.f32 %v618, 0.35355338
    %v649 = vmul.f32 %v646, 0.35355338
    %v650 = vadd.f32 %v648, %v273
    %v651 = vadd.f32 %v649, %v274
    %v652 = vsel %vm275, %v650, -inf
    %653 = vmax.xlane.f32.xlu0 %v652
    %v654 = vpop.xlane.xlu0 %653
    %v655 = vsel %vm275, %v651, -inf
    %656 = vmax.xlane.f32.xlu0 %v655
    %v657 = vpop.xlane.xlu0 %656
    %v658 = vsub.f32 %v650, %v654
    %v659 = vsub.f32 %v651, %v657
    %v660 = vmul.f32 %v658, 1.442695
    %v661 = vpow.pop %v660
    %v662 = vmul.f32 %v659, 1.442695
    %v663 = vpow.pop %v662
    %v664 = vsel %vm275, %v661, 0.0
    %665 = vadd.xlane.f32.xlu0 %v664
    %v666 = vpop.xlane.xlu0 %665
    %v667 = vsel %vm275, %v663, 0.0
    %668 = vadd.xlane.f32.xlu0 %v667
    %v669 = vpop.xlane.xlu0 %668
    %v670 = vrcp.pop %v666
    %v671 = vmul.f32 %v666, %v670
    %v672 = vsub.f32 1.0, %v671
    %v673 = vmul.f32 %v670, %v672
    %v674 = vadd.f32 %v670, %v673
    %vm675 = vweird.f32 %v666
    %vm676 = vweird.f32 %v670
    %vm677 = vmor %vm675, %vm676
    %v678 = vsel %vm677, %v670, %v674
    %v679 = vand.u32 2147483647, %v666
    %vm680 = vcmp.eq.f32.partialorder %v679, 8.507059e+37
    %v681 = vand.u32 %v666, 2147483648
    %v682 = vor.u32 1.1754944e-38, %v681
    %v683 = vsel %vm680, %v682, %v678
    %v684 = vmul.f32 1.0, %v683
    %v685 = vrcp.pop %v669
    %v686 = vmul.f32 %v669, %v685
    %v687 = vsub.f32 1.0, %v686
    %v688 = vmul.f32 %v685, %v687
    %v689 = vadd.f32 %v685, %v688
    %vm690 = vweird.f32 %v669
    %vm691 = vweird.f32 %v685
    %vm692 = vmor %vm690, %vm691
    %v693 = vsel %vm692, %v685, %v689
    %v694 = vand.u32 2147483647, %v669
    %vm695 = vcmp.eq.f32.partialorder %v694, 8.507059e+37
    %v696 = vand.u32 %v669, 2147483648
    %v697 = vor.u32 1.1754944e-38, %v696
    %v698 = vsel %vm695, %v697, %v693
    %v699 = vmul.f32 1.0, %v698
    %v700 = vmul.f32 %v661, %v684
    %v701 = vmul.f32 %v663, %v699
    %702 = vrot.lane.b32.xlu0 %v264, 112
    %v703 = vpop.permute.xlu0 %702
    %v706 = vsel %vm275, %v700, 0
    %708 = vmatpush.msra.mxu0 0.0
    %709 = vmatpush.msra.mxu0 0.0
    %710 = vmatpush.msra.mxu0 0.0
    %711 = vmatpush.msra.mxu0 0.0
    %712 = vmatpush.msra.mxu0 0.0
    %713 = vmatpush.msra.mxu0 0.0
    %714 = vmatpush.msra.mxu0 0.0
    %715 = vmatpush.msra.mxu0 0.0
    %716 = vmatpush.msra.mxu0 0.0
    %717 = vmatpush.msra.mxu0 0.0
    %718 = vmatpush.msra.mxu0 0.0
    %719 = vmatpush.msra.mxu0 0.0
    %720 = vmatpush.msra.mxu0 0.0
    %721 = vmatpush.msra.mxu0 0.0
    %722 = vmatpush.msra.mxu0 0.0
    %723 = vmatpush.msra.mxu0 %v703
    %724 = vmatmul.f32.gmra.mxu0 %v706
    %v725 = vpop.f32.mrf.mxu0
    %v726 = vadd.f32 0.0, %v725
    %727 = vdwg.mxu0
    %728 = vrot.lane.b32.xlu0 %v267, 112
    %v729 = vpop.permute.xlu0 %728
    %v732 = vsel %vm275, %v701, 0
    %734 = vmatpush.msra.mxu0 0.0
    %735 = vmatpush.msra.mxu0 0.0
    %736 = vmatpush.msra.mxu0 0.0
    %737 = vmatpush.msra.mxu0 0.0
    %738 = vmatpush.msra.mxu0 0.0
    %739 = vmatpush.msra.mxu0 0.0
    %740 = vmatpush.msra.mxu0 0.0
    %741 = vmatpush.msra.mxu0 0.0
    %742 = vmatpush.msra.mxu0 0.0
    %743 = vmatpush.msra.mxu0 0.0
    %744 = vmatpush.msra.mxu0 0.0
    %745 = vmatpush.msra.mxu0 0.0
    %746 = vmatpush.msra.mxu0 0.0
    %747 = vmatpush.msra.mxu0 0.0
    %748 = vmatpush.msra.mxu0 0.0
    %749 = vmatpush.msra.mxu0 %v729
    %750 = vmatmul.f32.gmra.mxu0 %v732
    %v751 = vpop.f32.mrf.mxu0
    %v752 = vadd.f32 0.0, %v751
    %753 = vdwg.mxu0
    %754 = vrot.lane.b32.xlu0 %v194, 104
    %v755 = vpop.permute.xlu0 %754
    %756 = vrot.lane.b32.xlu0 %v229, 104
    %v757 = vpop.permute.xlu0 %756
    %v758 = vsel %vm275, %v755, 0
    %v760 = vsel %vm275, %v757, 0
    %762 = vmatpush.xpose.msra.mxu0 0.0
    %763 = vmatpush.xpose.msra.mxu0 0.0
    %764 = vmatpush.xpose.msra.mxu0 0.0
    %765 = vmatpush.xpose.msra.mxu0 0.0
    %766 = vmatpush.xpose.msra.mxu0 0.0
    %767 = vmatpush.xpose.msra.mxu0 0.0
    %768 = vmatpush.xpose.msra.mxu0 0.0
    %769 = vmatpush.xpose.msra.mxu0 0.0
    %770 = vmatpush.xpose.msra.mxu0 0.0
    %771 = vmatpush.xpose.msra.mxu0 0.0
    %772 = vmatpush.xpose.msra.mxu0 0.0
    %773 = vmatpush.xpose.msra.mxu0 0.0
    %774 = vmatpush.xpose.msra.mxu0 0.0
    %775 = vmatpush.xpose.msra.mxu0 0.0
    %776 = vmatpush.xpose.msra.mxu0 0.0
    %777 = vmatpush.xpose.msra.mxu0 %v760
    %778 = vmatmul.f32.gmra.mxu0 %v758
    %v779 = vpop.f32.mrf.mxu0
    %v780 = vadd.f32 0.0, %v779
    %781 = vdwg.mxu0
    %782 = vrot.lane.b32.xlu0 %v197, 104
    %v783 = vpop.permute.xlu0 %782
    %784 = vrot.lane.b32.xlu0 %v232, 104
    %v785 = vpop.permute.xlu0 %784
    %v786 = vsel %vm275, %v783, 0
    %v788 = vsel %vm275, %v785, 0
    %790 = vmatpush.xpose.msra.mxu0 0.0
    %791 = vmatpush.xpose.msra.mxu0 0.0
    %792 = vmatpush.xpose.msra.mxu0 0.0
    %793 = vmatpush.xpose.msra.mxu0 0.0
    %794 = vmatpush.xpose.msra.mxu0 0.0
    %795 = vmatpush.xpose.msra.mxu0 0.0
    %796 = vmatpush.xpose.msra.mxu0 0.0
    %797 = vmatpush.xpose.msra.mxu0 0.0
    %798 = vmatpush.xpose.msra.mxu0 0.0
    %799 = vmatpush.xpose.msra.mxu0 0.0
    %800 = vmatpush.xpose.msra.mxu0 0.0
    %801 = vmatpush.xpose.msra.mxu0 0.0
    %802 = vmatpush.xpose.msra.mxu0 0.0
    %803 = vmatpush.xpose.msra.mxu0 0.0
    %804 = vmatpush.xpose.msra.mxu0 0.0
    %805 = vmatpush.xpose.msra.mxu0 %v788
    %806 = vmatmul.f32.gmra.mxu0 %v786
    %v807 = vpop.f32.mrf.mxu0
    %v808 = vadd.f32 0.0, %v807
    %809 = vdwg.mxu0
    %v810 = vmul.f32 %v780, 0.35355338
    %v811 = vmul.f32 %v808, 0.35355338
    %v812 = vadd.f32 %v810, %v273
    %v813 = vadd.f32 %v811, %v274
    %v814 = vsel %vm275, %v812, -inf
    %815 = vmax.xlane.f32.xlu0 %v814
    %v816 = vpop.xlane.xlu0 %815
    %v817 = vsel %vm275, %v813, -inf
    %818 = vmax.xlane.f32.xlu0 %v817
    %v819 = vpop.xlane.xlu0 %818
    %v820 = vsub.f32 %v812, %v816
    %v821 = vsub.f32 %v813, %v819
    %v822 = vmul.f32 %v820, 1.442695
    %v823 = vpow.pop %v822
    %v824 = vmul.f32 %v821, 1.442695
    %v825 = vpow.pop %v824
    %v826 = vsel %vm275, %v823, 0.0
    %827 = vadd.xlane.f32.xlu0 %v826
    %v828 = vpop.xlane.xlu0 %827
    %v829 = vsel %vm275, %v825, 0.0
    %830 = vadd.xlane.f32.xlu0 %v829
    %v831 = vpop.xlane.xlu0 %830
    %v832 = vrcp.pop %v828
    %v833 = vmul.f32 %v828, %v832
    %v834 = vsub.f32 1.0, %v833
    %v835 = vmul.f32 %v832, %v834
    %v836 = vadd.f32 %v832, %v835
    %vm837 = vweird.f32 %v828
    %vm838 = vweird.f32 %v832
    %vm839 = vmor %vm837, %vm838
    %v840 = vsel %vm839, %v832, %v836
    %v841 = vand.u32 2147483647, %v828
    %vm842 = vcmp.eq.f32.partialorder %v841, 8.507059e+37
    %v843 = vand.u32 %v828, 2147483648
    %v844 = vor.u32 1.1754944e-38, %v843
    %v845 = vsel %vm842, %v844, %v840
    %v846 = vmul.f32 1.0, %v845
    %v847 = vrcp.pop %v831
    %v848 = vmul.f32 %v831, %v847
    %v849 = vsub.f32 1.0, %v848
    %v850 = vmul.f32 %v847, %v849
    %v851 = vadd.f32 %v847, %v850
    %vm852 = vweird.f32 %v831
    %vm853 = vweird.f32 %v847
    %vm854 = vmor %vm852, %vm853
    %v855 = vsel %vm854, %v847, %v851
    %v856 = vand.u32 2147483647, %v831
    %vm857 = vcmp.eq.f32.partialorder %v856, 8.507059e+37
    %v858 = vand.u32 %v831, 2147483648
    %v859 = vor.u32 1.1754944e-38, %v858
    %v860 = vsel %vm857, %v859, %v855
    %v861 = vmul.f32 1.0, %v860
    %v862 = vmul.f32 %v823, %v846
    %v863 = vmul.f32 %v825, %v861
    %864 = vrot.lane.b32.xlu0 %v264, 104
    %v865 = vpop.permute.xlu0 %864
    %v868 = vsel %vm275, %v862, 0
    %870 = vmatpush.msra.mxu0 0.0
    %871 = vmatpush.msra.mxu0 0.0
    %872 = vmatpush.msra.mxu0 0.0
    %873 = vmatpush.msra.mxu0 0.0
    %874 = vmatpush.msra.mxu0 0.0
    %875 = vmatpush.msra.mxu0 0.0
    %876 = vmatpush.msra.mxu0 0.0
    %877 = vmatpush.msra.mxu0 0.0
    %878 = vmatpush.msra.mxu0 0.0
    %879 = vmatpush.msra.mxu0 0.0
    %880 = vmatpush.msra.mxu0 0.0
    %881 = vmatpush.msra.mxu0 0.0
    %882 = vmatpush.msra.mxu0 0.0
    %883 = vmatpush.msra.mxu0 0.0
    %884 = vmatpush.msra.mxu0 0.0
    %885 = vmatpush.msra.mxu0 %v865
    %886 = vmatmul.f32.gmra.mxu0 %v868
    %v887 = vpop.f32.mrf.mxu0
    %v888 = vadd.f32 0.0, %v887
    %889 = vdwg.mxu0
    %890 = vrot.lane.b32.xlu0 %v267, 104
    %v891 = vpop.permute.xlu0 %890
    %v894 = vsel %vm275, %v863, 0
    %896 = vmatpush.msra.mxu0 0.0
    %897 = vmatpush.msra.mxu0 0.0
    %898 = vmatpush.msra.mxu0 0.0
    %899 = vmatpush.msra.mxu0 0.0
    %900 = vmatpush.msra.mxu0 0.0
    %901 = vmatpush.msra.mxu0 0.0
    %902 = vmatpush.msra.mxu0 0.0
    %903 = vmatpush.msra.mxu0 0.0
    %904 = vmatpush.msra.mxu0 0.0
    %905 = vmatpush.msra.mxu0 0.0
    %906 = vmatpush.msra.mxu0 0.0
    %907 = vmatpush.msra.mxu0 0.0
    %908 = vmatpush.msra.mxu0 0.0
    %909 = vmatpush.msra.mxu0 0.0
    %910 = vmatpush.msra.mxu0 0.0
    %911 = vmatpush.msra.mxu0 %v891
    %912 = vmatmul.f32.gmra.mxu0 %v894
    %v913 = vpop.f32.mrf.mxu0
    %v914 = vadd.f32 0.0, %v913
    %915 = vdwg.mxu0
    %918 = vrot.lane.b32.xlu0 %v563, 8
    %v919 = vpop.permute.xlu0 %918
    %920 = vrot.lane.b32.xlu0 %v590, 8
    %v921 = vpop.permute.xlu0 %920
    %926 = vrot.lane.b32.xlu0 %v726, 16
    %v927 = vpop.permute.xlu0 %926
    %928 = vrot.lane.b32.xlu0 %v752, 16
    %v929 = vpop.permute.xlu0 %928
    %934 = vrot.lane.b32.xlu0 %v888, 24
    %v935 = vpop.permute.xlu0 %934
    %936 = vrot.lane.b32.xlu0 %v914, 24
    %v937 = vpop.permute.xlu0 %936
    %v940 = vsel %vm275, %v403, %v919
    %v941 = vsel %vm275, %v426, %v921
    %vm942 = vcmask 130048
    %v943 = vsel %vm942, %v940, %v927
    %v944 = vsel %vm942, %v941, %v929
    %vm945 = vcmask 195584
    %v946 = vsel %vm945, %v943, %v935
    %v947 = vsel %vm945, %v944, %v937
    %s948 = scalar_lea.vmem [#allocation2], 96
    %v949 = vld [vmem:[%s948] sm:$0xff]
    %v950 = vld [vmem:[%s948 + $0x8] sm:$0xff]
    %v951 = vld [vmem:[%s948 + $0x10] sm:$0xff]
    %v952 = vld [vmem:[%s948 + $0x18] sm:$0xff]
    %v953 = vperm.slane %v71, 3
    %v955 = vsel %vm73, %v946, 0
    %v958 = vsel %vm73, %v947, 0
    %960 = vmatpush.msra.mxu0 0.0
    %961 = vmatpush.msra.mxu0 0.0
    %962 = vmatpush.msra.mxu0 0.0
    %963 = vmatpush.msra.mxu0 0.0
    %964 = vmatpush.msra.mxu0 0.0
    %965 = vmatpush.msra.mxu0 0.0
    %966 = vmatpush.msra.mxu0 0.0
    %967 = vmatpush.msra.mxu0 0.0
    %968 = vmatpush.msra.mxu0 0.0
    %969 = vmatpush.msra.mxu0 0.0
    %970 = vmatpush.msra.mxu0 0.0
    %971 = vmatpush.msra.mxu0 0.0
    %972 = vmatpush.msra.mxu0 %v952
    %973 = vmatpush.msra.mxu0 %v951
    %974 = vmatpush.msra.mxu0 %v950
    %975 = vmatpush.msra.mxu0 %v949
    %976 = vmatmul.f32.gmra.mxu0 %v955
    %v977 = vpop.f32.mrf.mxu0
    %v978 = vadd.f32 %v953, %v977
    %979 = vmatmul.f32.gmra.mxu0 %v958
    %v980 = vpop.f32.mrf.mxu0
    %v981 = vadd.f32 %v953, %v980
    %982 = vdwg.mxu0
    %v983 = vadd.f32 %v65, %v978
    %v984 = vadd.f32 %v66, %v981
    %v985 = vsel %vm73, %v983, 0.0
    %986 = vadd.xlane.f32.xlu0 %v985
    %v987 = vpop.xlane.xlu0 %986
    %v988 = vsel %vm73, %v984, 0.0
    %989 = vadd.xlane.f32.xlu0 %v988
    %v990 = vpop.xlane.xlu0 %989
    %v991 = vmul.f32 %v987, %v86
    %v992 = vmul.f32 %v990, %v86
    %v993 = vsub.f32 %v983, %v991
    %v994 = vsub.f32 %v984, %v992
    %v995 = vmul.f32 %v993, %v993
    %v996 = vmul.f32 %v994, %v994
    %v997 = vsel %vm73, %v995, 0.0
    %998 = vadd.xlane.f32.xlu0 %v997
    %v999 = vpop.xlane.xlu0 %998
    %v1000 = vsel %vm73, %v996, 0.0
    %1001 = vadd.xlane.f32.xlu0 %v1000
    %v1002 = vpop.xlane.xlu0 %1001
    %v1003 = vmul.f32 %v999, 0.032258064
    %v1004 = vmul.f32 %v1002, 0.032258064
    %v1005 = vrsqrt.pop %v1003
    %v1006 = vmul.f32 %v1005, %v1003
    %v1007 = vmul.f32 %v1006, %v1005
    %v1008 = vmul.f32 0.5, %v1007
    %v1009 = vsub.f32 1.5, %v1008
    %v1010 = vmul.f32 %v1005, %v1009
    %v1011 = vmul.f32 %v1003, %v1010
    %vm1012 = vcmp.eq.f32.partialorder %v1003, inf
    %v1013 = vsel %vm1012, %v1003, %v1011
    %vm1014 = vcmp.eq.f32.partialorder %v1003, 0.0
    %v1015 = vand.u32 %v1003, 2147483648
    %v1016 = vsel %vm1014, %v1015, %v1013
    %v1017 = vrsqrt.pop %v1004
    %v1018 = vmul.f32 %v1017, %v1004
    %v1019 = vmul.f32 %v1018, %v1017
    %v1020 = vmul.f32 0.5, %v1019
    %v1021 = vsub.f32 1.5, %v1020
    %v1022 = vmul.f32 %v1017, %v1021
    %v1023 = vmul.f32 %v1004, %v1022
    %vm1024 = vcmp.eq.f32.partialorder %v1004, inf
    %v1025 = vsel %vm1024, %v1004, %v1023
    %vm1026 = vcmp.eq.f32.partialorder %v1004, 0.0
    %v1027 = vand.u32 %v1004, 2147483648
    %v1028 = vsel %vm1026, %v1027, %v1025
    %v1029 = vadd.f32 %v1016, 1e-06
    %v1030 = vadd.f32 %v1028, 1e-06
    %v1031 = vrcp.pop %v1029
    %v1032 = vmul.f32 %v1029, %v1031
    %v1033 = vsub.f32 1.0, %v1032
    %v1034 = vmul.f32 %v1031, %v1033
    %v1035 = vadd.f32 %v1031, %v1034
    %vm1036 = vweird.f32 %v1029
    %vm1037 = vweird.f32 %v1031
    %vm1038 = vmor %vm1036, %vm1037
    %v1039 = vsel %vm1038, %v1031, %v1035
    %v1040 = vand.u32 2147483647, %v1029
    %vm1041 = vcmp.eq.f32.partialorder %v1040, 8.507059e+37
    %v1042 = vand.u32 %v1029, 2147483648
    %v1043 = vor.u32 1.1754944e-38, %v1042
    %v1044 = vsel %vm1041, %v1043, %v1039
    %v1045 = vmul.f32 1.0, %v1044
    %v1046 = vrcp.pop %v1030
    %v1047 = vmul.f32 %v1030, %v1046
    %v1048 = vsub.f32 1.0, %v1047
    %v1049 = vmul.f32 %v1046, %v1048
    %v1050 = vadd.f32 %v1046, %v1049
    %vm1051 = vweird.f32 %v1030
    %vm1052 = vweird.f32 %v1046
    %vm1053 = vmor %vm1051, %vm1052
    %v1054 = vsel %vm1053, %v1046, %v1050
    %v1055 = vand.u32 2147483647, %v1030
    %vm1056 = vcmp.eq.f32.partialorder %v1055, 8.507059e+37
    %v1057 = vand.u32 %v1030, 2147483648
    %v1058 = vor.u32 1.1754944e-38, %v1057
    %v1059 = vsel %vm1056, %v1058, %v1054
    %v1060 = vmul.f32 1.0, %v1059
    %v1061 = vperm.slane %v71, 6
    %v1062 = vmul.f32 %v1061, %v993
    %v1063 = vmul.f32 %v1061, %v994
    %v1064 = vmul.f32 %v1062, %v1045
    %v1065 = vmul.f32 %v1063, %v1060
    %v1066 = vperm.slane %v71, 7
    %v1067 = vadd.f32 %v1064, %v1066
    %v1068 = vadd.f32 %v1065, %v1066
    %v1069 = vld [vmem:[%s6] sm:$0xff]
    %v1070 = vld [vmem:[%s6 + $0x8] sm:$0xff]
    %v1071 = vld [vmem:[%s6 + $0x10] sm:$0xff]
    %v1072 = vld [vmem:[%s6 + $0x18] sm:$0xff]
    %v1073 = vld [vmem:[%s7] sm:$0x1]
    %v1075 = vperm.slane %v1073, 0
    %v1078 = vsel %vm73, %v1067, 0
    %v1081 = vsel %vm73, %v1068, 0
    %1083 = vmatpush.msra.mxu0 0.0
    %1084 = vmatpush.msra.mxu0 0.0
    %1085 = vmatpush.msra.mxu0 0.0
    %1086 = vmatpush.msra.mxu0 0.0
    %1087 = vmatpush.msra.mxu0 0.0
    %1088 = vmatpush.msra.mxu0 0.0
    %1089 = vmatpush.msra.mxu0 0.0
    %1090 = vmatpush.msra.mxu0 0.0
    %1091 = vmatpush.msra.mxu0 0.0
    %1092 = vmatpush.msra.mxu0 0.0
    %1093 = vmatpush.msra.mxu0 0.0
    %1094 = vmatpush.msra.mxu0 0.0
    %1095 = vmatpush.msra.mxu0 %v1072
    %1096 = vmatpush.msra.mxu0 %v1071
    %1097 = vmatpush.msra.mxu0 %v1070
    %1098 = vmatpush.msra.mxu0 %v1069
    %1099 = vmatmul.f32.gmra.mxu0 %v1078
    %v1100 = vpop.f32.mrf.mxu0
    %v1101 = vadd.f32 %v1075, %v1100
    %1102 = vmatmul.f32.gmra.mxu0 %v1081
    %v1103 = vpop.f32.mrf.mxu0
    %v1104 = vadd.f32 %v1075, %v1103
    %1105 = vdwg.mxu0
    %v1106 = vmax.f32 %v1101, 0.0
    %v1107 = vmax.f32 %v1104, 0.0
    %v1108 = vld [vmem:[%s8] sm:$0xff]
    %v1109 = vld [vmem:[%s8 + $0x8] sm:$0xff]
    %v1110 = vld [vmem:[%s8 + $0x10] sm:$0xff]
    %v1111 = vld [vmem:[%s8 + $0x18] sm:$0xff]
    %v1112 = vld [vmem:[%s8 + $0x20] sm:$0xff]
    %v1113 = vld [vmem:[%s8 + $0x28] sm:$0xff]
    %v1114 = vld [vmem:[%s8 + $0x30] sm:$0xff]
    %v1115 = vld [vmem:[%s8 + $0x38] sm:$0xff]
    %v1116 = vperm.slane %v72, 0
    %vm1117 = vcmask 523264
    %v1119 = vsel %vm1117, %v1106, 0
    %v1122 = vsel %vm1117, %v1107, 0
    %1124 = vmatpush.msra.mxu0 0.0
    %1125 = vmatpush.msra.mxu0 0.0
    %1126 = vmatpush.msra.mxu0 0.0
    %1127 = vmatpush.msra.mxu0 0.0
    %1128 = vmatpush.msra.mxu0 0.0
    %1129 = vmatpush.msra.mxu0 0.0
    %1130 = vmatpush.msra.mxu0 0.0
    %1131 = vmatpush.msra.mxu0 0.0
    %1132 = vmatpush.msra.mxu0 %v1115
    %1133 = vmatpush.msra.mxu0 %v1114
    %1134 = vmatpush.msra.mxu0 %v1113
    %1135 = vmatpush.msra.mxu0 %v1112
    %1136 = vmatpush.msra.mxu0 %v1111
    %1137 = vmatpush.msra.mxu0 %v1110
    %1138 = vmatpush.msra.mxu0 %v1109
    %1139 = vmatpush.msra.mxu0 %v1108
    %1140 = vmatmul.f32.gmra.mxu0 %v1119
    %v1141 = vpop.f32.mrf.mxu0
    %v1142 = vadd.f32 %v1116, %v1141
    %1143 = vmatmul.f32.gmra.mxu0 %v1122
    %v1144 = vpop.f32.mrf.mxu0
    %v1145 = vadd.f32 %v1116, %v1144
    %1146 = vdwg.mxu0
    %v1147 = vadd.f32 %v983, %v1142
    %v1148 = vadd.f32 %v984, %v1145
    %1149 = vst.msk [vmem:[#allocation7] sm:$0xff] %vm73, %v1147
    %1150 = vst.msk [vmem:[#allocation7 + $0x8] sm:$0xff] %vm73, %v1148
    // Predicated region
    $region46: #{tpu_custom_call.1} parent=1 // pred_check
      _
    $region47: #{tpu_custom_call.1} parent=1 // pred_check_branch
      %1152 = sbr.rel (0) target = $region49
    $region48: #{tpu_custom_call.1} parent=1 // pred_region
      %1154 = vsyncadd [#allocation4], 0
      %s1155 = sshll.u32 [#allocation7], 4
      %s1156 = int_to_ptr.vmem [resolvable:$true] %s1155
      %s1157 = sshll.u32 %s9, 4
      %s1158 = int_to_ptr.hbm [resolvable:$true] %s1157
      %1163 = dma.vmem_to_hbm [thread:$0]  %s1156, 256, %s1158, [#allocation4], 128, 128, 8
    $region49: #{tpu_custom_call.1} parent=1 // pred_fallthru
      _
    // Predicated region
    $region50: #{tpu_custom_call.1} parent=1 // pred_check
      _
    $region51: #{tpu_custom_call.1} parent=1 // pred_check_branch
      %1165 = sbr.rel (0) target = $region53
    $region52: #{tpu_custom_call.1} parent=1 // pred_region
      %1167 = dma.done [#allocation4], 256
    $region53: #{tpu_custom_call.1} parent=1 // pred_fallthru
      _
    %1168 = vsyncpa [#allocation3], 1
    %1169 = vsyncpa [#allocation6], 1
    %1170 = vsyncpa [#allocation4], 1

</llo_original>
